<compile_context>
chip_gen: v7x
topology: tpu7x:2x2x1
jax: 0.10.0
libtpu: 0.0.40
codegen_flags: <defaults>
</compile_context>

<pallas_src>
import functools

import jax
import jax.numpy as jnp
from jax.experimental import pallas as pl
from jax.experimental.pallas import tpu as pltpu


def _round_up(n, m):
    return -(-n // m) * m


def dqn_kernel(x_ref, w1_ref, b1_ref, w2_ref, b2_ref, w3_ref, b3_ref, out_ref):
    """One (batch-tile, network) grid step of the transposed 3-layer MLP.

    x_ref:  (S, TB)       states^T, batch on the 128-lane axis (shared across nets)
    wN_ref: (1, out, in)  weights for the current network (PyTorch (out,in) layout)
    bN_ref: (1, out, 1)   biases, broadcast along the batch lanes
    out_ref:(1, A, TB)    Q-values^T (lane-dense store, no action-dim padding)
    """
    # f32 operands -> exact f32 MXU path; bf16 operands -> native bf16 MXU.
    prec = (jax.lax.Precision.HIGHEST if x_ref.dtype == jnp.float32
            else jax.lax.Precision.DEFAULT)

    x = x_ref[...]                                                    # (S, TB)
    h1 = jnp.dot(w1_ref[0], x, precision=prec,
                 preferred_element_type=jnp.float32)                  # (H, TB)
    h1 = jnp.maximum(h1 + b1_ref[0], 0.0)                             # f32 epilogue
    h2 = jnp.dot(w2_ref[0], h1.astype(w2_ref.dtype), precision=prec,
                 preferred_element_type=jnp.float32)                  # (H, TB)
    h2 = jnp.maximum(h2 + b2_ref[0], 0.0)
    out = jnp.dot(w3_ref[0], h2.astype(w3_ref.dtype), precision=prec,
                  preferred_element_type=jnp.float32)                 # (A, TB)
    out_ref[0] = (out + b3_ref[0]).astype(out_ref.dtype)


@functools.partial(jax.jit, static_argnames=("tile_batch", "compute_dtype"))
def _dqn_forward_stacked(x, w1, b1, w2, b2, w3, b3, *,
                         tile_batch=2048, compute_dtype=jnp.bfloat16):
    """x: (B, S) f32.  wN: (N, out, in), bN: (N, out, 1).  Returns (N, B, A) f32."""
    B, S = x.shape
    N = w1.shape[0]
    A = w3.shape[1]

    # Batch rides the lane axis -> pad only to the 128-lane quantum.
    B_pad = _round_up(B, 128)
    lanes = B_pad // 128

    # Batch tile (in 128-lane units).  Large tiles amortize per-step overhead;
    # force >=2 tiles when an even 128-aligned split exists so v7x's two
    # TensorCores both get work on the "parallel" batch axis.
    n_tiles = max(1, -(-B_pad // tile_batch))
    if n_tiles == 1 and lanes >= 2 and lanes % 2 == 0:
        n_tiles = 2
    TB = -(-lanes // n_tiles) * 128
    grid_b = -(-B_pad // TB)

    # x^T (features, batch); cast (+ pad only when needed) in one XLA pass.
    xT = x.T.astype(compute_dtype)
    if B_pad != B:
        xT = jnp.zeros((S, B_pad), compute_dtype).at[:, :B].set(xT)

    w1 = w1.astype(compute_dtype)
    w2 = w2.astype(compute_dtype)
    w3 = w3.astype(compute_dtype)
    b1 = b1.astype(jnp.float32)
    b2 = b2.astype(jnp.float32)
    b3 = b3.astype(jnp.float32)

    def per_network(arr):
        # One network's (tiny) weights per grid step; index depends only on the
        # network axis, so they are not re-fetched across batch-invariant steps.
        return pl.BlockSpec((1,) + arr.shape[1:], lambda b, n: (n, 0, 0))

    out = pl.pallas_call(
        dqn_kernel,
        out_shape=jax.ShapeDtypeStruct((N, A, B_pad), jnp.float32),
        grid=(grid_b, N),
        in_specs=[
            pl.BlockSpec((S, TB), lambda b, n: (0, b)),   # x^T: tiled over batch,
                                                          # shared across networks
            per_network(w1), per_network(b1),
            per_network(w2), per_network(b2),
            per_network(w3), per_network(b3),
        ],
        out_specs=pl.BlockSpec((1, A, TB), lambda b, n: (n, 0, b)),
        compiler_params=pltpu.CompilerParams(
            dimension_semantics=("parallel", "parallel"),
        ),
    )(xT, w1, b1, w2, b2, w3, b3)

    # (N, A, B_pad) -> (N, B, A): tiny (A-wide) layout-plumbing transpose in XLA.
    return jnp.swapaxes(out[:, :, :B], 1, 2)


def dqn_forward(x, params, *, tile_batch=2048, compute_dtype=jnp.bfloat16):
    """Forward pass of one DQN.  x: (B, state_size) f32.
    params: dict of PyTorch-layout tensors
      w1 (H,S), b1 (H,1), w2 (H,H), b2 (H,1), w3 (A,H), b3 (A,1).
    Use compute_dtype=jnp.float32 where exact parity with the f32 model is needed
    (e.g. TD-target computation); bf16 is the faster lossy path."""
    stacked = [params[k][None] for k in ("w1", "b1", "w2", "b2", "w3", "b3")]
    out = _dqn_forward_stacked(x, *stacked, tile_batch=tile_batch,
                               compute_dtype=compute_dtype)
    return out[0]


def dqn_forward_multi(x, params_list, *, tile_batch=2048,
                      compute_dtype=jnp.bfloat16):
    """Fused forward through several DQNs (e.g. online + target network) over the
    same batch of states, in a single pallas_call.  Returns (num_nets, B, A)."""
    stacked = [jnp.stack([p[k] for p in params_list])
               for k in ("w1", "b1", "w2", "b2", "w3", "b3")]
    return _dqn_forward_stacked(x, *stacked, tile_batch=tile_batch,
                                compute_dtype=compute_dtype)


def init_params(key, state_size, action_size, hidden_size=32):
    """PyTorch nn.Linear default init: U(-1/sqrt(fan_in), 1/sqrt(fan_in)).
    Weights stored (out_features, in_features); biases stored (out_features, 1)."""
    def linear(k, fan_in, fan_out):
        kw, kb = jax.random.split(k)
        bound = 1.0 / jnp.sqrt(fan_in)
        w = jax.random.uniform(kw, (fan_out, fan_in), jnp.float32, -bound, bound)
        b = jax.random.uniform(kb, (fan_out, 1), jnp.float32, -bound, bound)
        return w, b

    k1, k2, k3 = jax.random.split(key, 3)
    w1, b1 = linear(k1, state_size, hidden_size)
    w2, b2 = linear(k2, hidden_size, hidden_size)
    w3, b3 = linear(k3, hidden_size, action_size)
    return {"w1": w1, "b1": b1, "w2": w2, "b2": b2, "w3": w3, "b3": b3}


def dqn_reference(x, params):
    hp = jax.lax.Precision.HIGHEST
    h1 = jax.nn.relu(jnp.dot(x, params["w1"].T, precision=hp) + params["b1"][:, 0])
    h2 = jax.nn.relu(jnp.dot(h1, params["w2"].T, precision=hp) + params["b2"][:, 0])
    return jnp.dot(h2, params["w3"].T, precision=hp) + params["b3"][:, 0]


if __name__ == "__main__":
    state_size, action_size, hidden_size = 8, 4, 32

    key = jax.random.PRNGKey(0)
    kx, kxb, kp1, kp2 = jax.random.split(key, 4)

    # --- single network, tiny batch (batch=2) ---
    x = jax.random.normal(kx, (2, state_size), dtype=jnp.float32)
    online = init_params(kp1, state_size, action_size, hidden_size)
    target = init_params(kp2, state_size, action_size, hidden_size)
    ref = dqn_reference(x, online)

    out_f32 = jax.block_until_ready(
        dqn_forward(x, online, compute_dtype=jnp.float32))
    assert out_f32.shape == (2, action_size)
    assert jnp.allclose(out_f32, ref, atol=1e-4, rtol=1e-4)

    out_bf16 = jax.block_until_ready(dqn_forward(x, online))   # bf16 perf path
    assert out_bf16.shape == (2, action_size)
    assert jnp.allclose(out_bf16, ref, atol=5e-2, rtol=5e-2)

    # --- fused online+target forward, multi-tile batch grid (2 tiles x 2 nets) ---
    xb = jax.random.normal(kxb, (256, state_size), dtype=jnp.float32)
    both = jax.block_until_ready(
        dqn_forward_multi(xb, (online, target), compute_dtype=jnp.float32))
    assert both.shape == (2, 256, action_size)
    assert jnp.allclose(both[0], dqn_reference(xb, online), atol=1e-4, rtol=1e-4)
    assert jnp.allclose(both[1], dqn_reference(xb, target), atol=1e-4, rtol=1e-4)

    print("KERNEL_OK")
</pallas_src>

<mosaic_0001>
module attributes {stable_mosaic.version = 11 : i64} {
  func.func @dqn_kernel(%arg0: i32, %arg1: i32, %arg2: memref<8x128xf32, #tpu.memory_space<vmem>>, %arg3: memref<1x32x8xf32, #tpu.memory_space<vmem>>, %arg4: memref<1x32x1xf32, #tpu.memory_space<vmem>>, %arg5: memref<1x32x32xf32, #tpu.memory_space<vmem>>, %arg6: memref<1x32x1xf32, #tpu.memory_space<vmem>>, %arg7: memref<1x4x32xf32, #tpu.memory_space<vmem>>, %arg8: memref<1x4x1xf32, #tpu.memory_space<vmem>>, %arg9: memref<1x4x128xf32, #tpu.memory_space<vmem>>) attributes {dimension_semantics = [#tpu.dimension_semantics<parallel>, #tpu.dimension_semantics<parallel>], iteration_bounds = array<i64: 1, 1>, scalar_prefetch = 0 : i64, scratch_operands = 0 : i64, tpu.core_type = #tpu.core_type<tc>, window_params = [{transform_indices = @transform_0, window_bounds = array<i64: 8, 128>}, {transform_indices = @transform_1, window_bounds = array<i64: 1, 32, 8>}, {transform_indices = @transform_2, window_bounds = array<i64: 1, 32, 1>}, {transform_indices = @transform_3, window_bounds = array<i64: 1, 32, 32>}, {transform_indices = @transform_4, window_bounds = array<i64: 1, 32, 1>}, {transform_indices = @transform_5, window_bounds = array<i64: 1, 4, 32>}, {transform_indices = @transform_6, window_bounds = array<i64: 1, 4, 1>}, {transform_indices = @transform_7, window_bounds = array<i64: 1, 4, 128>}]} {
    %c0 = arith.constant 0 : index
    %c0_0 = arith.constant 0 : index
    %0 = vector.load %arg2[%c0, %c0_0] : memref<8x128xf32, #tpu.memory_space<vmem>>, vector<8x128xf32>
    %c0_1 = arith.constant 0 : index
    %c0_2 = arith.constant 0 : index
    %c0_3 = arith.constant 0 : index
    %1 = vector.load %arg3[%c0_1, %c0_2, %c0_3] : memref<1x32x8xf32, #tpu.memory_space<vmem>>, vector<1x32x8xf32>
    %2 = vector.shape_cast %1 : vector<1x32x8xf32> to vector<32x8xf32>
    %cst = arith.constant dense<0.000000e+00> : vector<32x128xf32>
    %3 = tpu.matmul %2, %0, %cst {dimension_numbers = #tpu.dot_dimension_numbers<[1], [0], [0], [1], [0, 0, 1, 1], [], []>, precision = #tpu.contract_precision<fp32>} : vector<32x8xf32>, vector<8x128xf32>, vector<32x128xf32> -> vector<32x128xf32>
    %c0_4 = arith.constant 0 : index
    %c0_5 = arith.constant 0 : index
    %c0_6 = arith.constant 0 : index
    %4 = vector.load %arg4[%c0_4, %c0_5, %c0_6] : memref<1x32x1xf32, #tpu.memory_space<vmem>>, vector<1x32x1xf32>
    %5 = vector.shape_cast %4 : vector<1x32x1xf32> to vector<32x1xf32>
    %6 = vector.broadcast %5 : vector<32x1xf32> to vector<32x128xf32>
    %7 = arith.addf %3, %6 : vector<32x128xf32>
    %cst_7 = arith.constant 0.000000e+00 : f32
    %8 = vector.broadcast %cst_7 : f32 to vector<32x128xf32>
    %9 = arith.maximumf %7, %8 : vector<32x128xf32>
    %c0_8 = arith.constant 0 : index
    %c0_9 = arith.constant 0 : index
    %c0_10 = arith.constant 0 : index
    %10 = vector.load %arg5[%c0_8, %c0_9, %c0_10] : memref<1x32x32xf32, #tpu.memory_space<vmem>>, vector<1x32x32xf32>
    %11 = vector.shape_cast %10 : vector<1x32x32xf32> to vector<32x32xf32>
    %cst_11 = arith.constant dense<0.000000e+00> : vector<32x128xf32>
    %12 = tpu.matmul %11, %9, %cst_11 {dimension_numbers = #tpu.dot_dimension_numbers<[1], [0], [0], [1], [0, 0, 1, 1], [], []>, precision = #tpu.contract_precision<fp32>} : vector<32x32xf32>, vector<32x128xf32>, vector<32x128xf32> -> vector<32x128xf32>
    %c0_12 = arith.constant 0 : index
    %c0_13 = arith.constant 0 : index
    %c0_14 = arith.constant 0 : index
    %13 = vector.load %arg6[%c0_12, %c0_13, %c0_14] : memref<1x32x1xf32, #tpu.memory_space<vmem>>, vector<1x32x1xf32>
    %14 = vector.shape_cast %13 : vector<1x32x1xf32> to vector<32x1xf32>
    %15 = vector.broadcast %14 : vector<32x1xf32> to vector<32x128xf32>
    %16 = arith.addf %12, %15 : vector<32x128xf32>
    %cst_15 = arith.constant 0.000000e+00 : f32
    %17 = vector.broadcast %cst_15 : f32 to vector<32x128xf32>
    %18 = arith.maximumf %16, %17 : vector<32x128xf32>
    %c0_16 = arith.constant 0 : index
    %c0_17 = arith.constant 0 : index
    %c0_18 = arith.constant 0 : index
    %19 = vector.load %arg7[%c0_16, %c0_17, %c0_18] : memref<1x4x32xf32, #tpu.memory_space<vmem>>, vector<1x4x32xf32>
    %20 = vector.shape_cast %19 : vector<1x4x32xf32> to vector<4x32xf32>
    %cst_19 = arith.constant dense<0.000000e+00> : vector<4x128xf32>
    %21 = tpu.matmul %20, %18, %cst_19 {dimension_numbers = #tpu.dot_dimension_numbers<[1], [0], [0], [1], [0, 0, 1, 1], [], []>, precision = #tpu.contract_precision<fp32>} : vector<4x32xf32>, vector<32x128xf32>, vector<4x128xf32> -> vector<4x128xf32>
    %c0_20 = arith.constant 0 : index
    %c0_21 = arith.constant 0 : index
    %c0_22 = arith.constant 0 : index
    %22 = vector.load %arg8[%c0_20, %c0_21, %c0_22] : memref<1x4x1xf32, #tpu.memory_space<vmem>>, vector<1x4x1xf32>
    %23 = vector.shape_cast %22 : vector<1x4x1xf32> to vector<4x1xf32>
    %24 = vector.broadcast %23 : vector<4x1xf32> to vector<4x128xf32>
    %25 = arith.addf %21, %24 : vector<4x128xf32>
    %c0_23 = arith.constant 0 : index
    %c0_24 = arith.constant 0 : index
    %c0_25 = arith.constant 0 : index
    %26 = vector.load %arg9[%c0_23, %c0_24, %c0_25] : memref<1x4x128xf32, #tpu.memory_space<vmem>>, vector<1x4x128xf32>
    %27 = vector.shape_cast %26 : vector<1x4x128xf32> to vector<4x128xf32>
    %28 = vector.shape_cast %25 : vector<4x128xf32> to vector<1x4x128xf32>
    tpu.vector_store %arg9[%c0_23, %c0_24, %c0_25], %28 {strides = array<i32>} : memref<1x4x128xf32, #tpu.memory_space<vmem>>, vector<1x4x128xf32>,
    return
  }
  func.func @transform_0(%arg0: i32, %arg1: i32) -> (i32, i32) {
    %c0_i32 = arith.constant 0 : i32
    %c0_i32_0 = arith.constant 0 : i32
    return %c0_i32, %arg0 : i32, i32
  }
  func.func @transform_1(%arg0: i32, %arg1: i32) -> (i32, i32, i32) {
    %c0_i32 = arith.constant 0 : i32
    %c0_i32_0 = arith.constant 0 : i32
    %c0_i32_1 = arith.constant 0 : i32
    return %arg1, %c0_i32, %c0_i32_0 : i32, i32, i32
  }
  func.func @transform_2(%arg0: i32, %arg1: i32) -> (i32, i32, i32) {
    %c0_i32 = arith.constant 0 : i32
    %c0_i32_0 = arith.constant 0 : i32
    %c0_i32_1 = arith.constant 0 : i32
    return %arg1, %c0_i32, %c0_i32_0 : i32, i32, i32
  }
  func.func @transform_3(%arg0: i32, %arg1: i32) -> (i32, i32, i32) {
    %c0_i32 = arith.constant 0 : i32
    %c0_i32_0 = arith.constant 0 : i32
    %c0_i32_1 = arith.constant 0 : i32
    return %arg1, %c0_i32, %c0_i32_0 : i32, i32, i32
  }
  func.func @transform_4(%arg0: i32, %arg1: i32) -> (i32, i32, i32) {
    %c0_i32 = arith.constant 0 : i32
    %c0_i32_0 = arith.constant 0 : i32
    %c0_i32_1 = arith.constant 0 : i32
    return %arg1, %c0_i32, %c0_i32_0 : i32, i32, i32
  }
  func.func @transform_5(%arg0: i32, %arg1: i32) -> (i32, i32, i32) {
    %c0_i32 = arith.constant 0 : i32
    %c0_i32_0 = arith.constant 0 : i32
    %c0_i32_1 = arith.constant 0 : i32
    return %arg1, %c0_i32, %c0_i32_0 : i32, i32, i32
  }
  func.func @transform_6(%arg0: i32, %arg1: i32) -> (i32, i32, i32) {
    %c0_i32 = arith.constant 0 : i32
    %c0_i32_0 = arith.constant 0 : i32
    %c0_i32_1 = arith.constant 0 : i32
    return %arg1, %c0_i32, %c0_i32_0 : i32, i32, i32
  }
  func.func @transform_7(%arg0: i32, %arg1: i32) -> (i32, i32, i32) {
    %c0_i32 = arith.constant 0 : i32
    %c0_i32_0 = arith.constant 0 : i32
    return %arg1, %c0_i32, %arg0 : i32, i32, i32
  }
}

</mosaic_0001>

<llo_original>
// kernel: _dqn_forward_stacked.1
$region0: #{_dqn_forward_stacked.1}
  #allocation0 [shape = 'u32[]', space=smem, size = 0x4, offset = 0x4, fixed_abs, tag = 'smem constant byte address 0x4 - core index']
  #allocation1 [shape = 'u32[144,128]{1,0:T(1,128)}', space=vmem, size = 0x12000, scoped, tag = 'internal scratch']
  %s0 = inlined_call_operand.vmem [shape: f32[8,128], index: 0, kind: input, shape index: {}]
  %s1 = inlined_call_operand.vmem [shape: f32[1,32,8], index: 1, kind: input, shape index: {}]
  %s2 = inlined_call_operand.vmem [shape: f32[1,32,1], index: 2, kind: input, shape index: {}]
  %s3 = inlined_call_operand.vmem [shape: f32[1,32,32], index: 3, kind: input, shape index: {}]
  %s4 = inlined_call_operand.vmem [shape: f32[1,32,1], index: 4, kind: input, shape index: {}]
  %s5 = inlined_call_operand.vmem [shape: f32[1,4,32], index: 5, kind: input, shape index: {}]
  %s6 = inlined_call_operand.vmem [shape: f32[1,4,1], index: 6, kind: input, shape index: {}]
  %s7 = inlined_call_operand.vmem [shape: f32[1,4,128], index: 7, kind: output, shape index: {}]
  %s8 = sld [smem:[#allocation0]]
  $region38: #{_dqn_forward_stacked.1} parent=0
    _
  %s10 = ssub.s32 1, %s8
  %s11 = scalar_select 0, %s10, %s8
  // Predicated region
  $region2: #{_dqn_forward_stacked.1} parent=0 // pred_check
    _
  $region3: #{_dqn_forward_stacked.1} parent=0 // pred_check_branch
    %13 = sbr.rel (0) target = $region5
  $region4: #{_dqn_forward_stacked.1} parent=0 // pred_region
    _
  $region5: #{_dqn_forward_stacked.1} parent=0 // pred_fallthru
    _
  // Predicated region
  $region6: #{_dqn_forward_stacked.1} parent=0 // pred_check
    _
  $region7: #{_dqn_forward_stacked.1} parent=0 // pred_check_branch
    %15 = sbr.rel (0) target = $region9
  $region8: #{_dqn_forward_stacked.1} parent=0 // pred_region
    _
  $region9: #{_dqn_forward_stacked.1} parent=0 // pred_fallthru
    _
  // Predicated region
  $region10: #{_dqn_forward_stacked.1} parent=0 // pred_check
    _
  $region11: #{_dqn_forward_stacked.1} parent=0 // pred_check_branch
    %17 = sbr.rel (0) target = $region13
  $region12: #{_dqn_forward_stacked.1} parent=0 // pred_region
    _
  $region13: #{_dqn_forward_stacked.1} parent=0 // pred_fallthru
    _
  // Predicated region
  $region14: #{_dqn_forward_stacked.1} parent=0 // pred_check
    _
  $region15: #{_dqn_forward_stacked.1} parent=0 // pred_check_branch
    %19 = sbr.rel (0) target = $region17
  $region16: #{_dqn_forward_stacked.1} parent=0 // pred_region
    _
  $region17: #{_dqn_forward_stacked.1} parent=0 // pred_fallthru
    _
  // Predicated region
  $region18: #{_dqn_forward_stacked.1} parent=0 // pred_check
    _
  $region19: #{_dqn_forward_stacked.1} parent=0 // pred_check_branch
    %21 = sbr.rel (0) target = $region21
  $region20: #{_dqn_forward_stacked.1} parent=0 // pred_region
    _
  $region21: #{_dqn_forward_stacked.1} parent=0 // pred_fallthru
    _
  // Predicated region
  $region22: #{_dqn_forward_stacked.1} parent=0 // pred_check
    _
  $region23: #{_dqn_forward_stacked.1} parent=0 // pred_check_branch
    %23 = sbr.rel (0) target = $region25
  $region24: #{_dqn_forward_stacked.1} parent=0 // pred_region
    _
  $region25: #{_dqn_forward_stacked.1} parent=0 // pred_fallthru
    _
  // Predicated region
  $region26: #{_dqn_forward_stacked.1} parent=0 // pred_check
    _
  $region27: #{_dqn_forward_stacked.1} parent=0 // pred_check_branch
    %25 = sbr.rel (0) target = $region29
  $region28: #{_dqn_forward_stacked.1} parent=0 // pred_region
    _
  $region29: #{_dqn_forward_stacked.1} parent=0 // pred_fallthru
    _
  %v26 = vld [vmem:[%s0] sm:$0xff]
  %v27 = vld [vmem:[%s1] sm:$0xff]
  %v28 = vld [vmem:[%s1 + $0x8] sm:$0xff]
  %v29 = vld [vmem:[%s1 + $0x10] sm:$0xff]
  %v30 = vld [vmem:[%s1 + $0x18] sm:$0xff]
  %v31 = vld [vmem:[%s2] sm:$0xff]
  %v32 = vld [vmem:[%s2 + $0x8] sm:$0xff]
  %v33 = vld [vmem:[%s2 + $0x10] sm:$0xff]
  %v34 = vld [vmem:[%s2 + $0x18] sm:$0xff]
  %36 = vset.pattern.permute.xlu0 0
  %37 = vperm.xlu0 %36, %v31
  %v38 = vpop.permute.xlu0 %37
  %41 = vset.pattern.permute.xlu0 0
  %42 = vperm.xlu0 %41, %v32
  %v43 = vpop.permute.xlu0 %42
  %46 = vset.pattern.permute.xlu0 0
  %47 = vperm.xlu0 %46, %v33
  %v48 = vpop.permute.xlu0 %47
  %51 = vset.pattern.permute.xlu0 0
  %52 = vperm.xlu0 %51, %v34
  %v53 = vpop.permute.xlu0 %52
  %vm55 = vcmask 64512
  %v57 = vsel %vm55, %v27, 0
  %v60 = vsel %vm55, %v28, 0
  %v63 = vsel %vm55, %v29, 0
  %v66 = vsel %vm55, %v30, 0
  %68 = vmatprep.subr.mxu0 0.0
  %v69 = vand.u32 %v26, 4294901760
  %70 = vmatpush1.msra.mxu0 %v69
  %71 = vmatprep.subr.mxu0 0.0
  %72 = vmatpush1.msra.mxu0 0.0
  %73 = vmatprep.subr.mxu0 0.0
  %74 = vmatpush1.msra.mxu0 0.0
  %75 = vmatprep.subr.mxu0 0.0
  %76 = vmatpush1.msra.mxu0 0.0
  %77 = vmatprep.subr.mxu0 0.0
  %78 = vmatpush1.msra.mxu0 0.0
  %79 = vmatprep.subr.mxu0 0.0
  %80 = vmatpush1.msra.mxu0 0.0
  %81 = vmatprep.subr.mxu0 0.0
  %82 = vmatpush1.msra.mxu0 0.0
  %83 = vmatprep.subr.mxu0 0.0
  %84 = vmatpush1.msra.mxu0 0.0
  %85 = vmatprep.subr.mxu0 0.0
  %86 = vmatpush1.msra.mxu0 0.0
  %87 = vmatprep.subr.mxu0 0.0
  %88 = vmatpush1.msra.mxu0 0.0
  %89 = vmatprep.subr.mxu0 0.0
  %90 = vmatpush1.msra.mxu0 0.0
  %91 = vmatprep.subr.mxu0 0.0
  %92 = vmatpush1.msra.mxu0 0.0
  %93 = vmatprep.subr.mxu0 0.0
  %94 = vmatpush1.msra.mxu0 0.0
  %95 = vmatprep.subr.mxu0 0.0
  %96 = vmatpush1.msra.mxu0 0.0
  %97 = vmatprep.subr.mxu0 0.0
  %98 = vmatpush1.msra.mxu0 0.0
  %99 = vmatprep.subr.mxu0 0.0
  %100 = vmatpush1.msra.mxu0 0.0
  %101 = vmatprep.subr.mxu0 0.0
  %102 = vmatpush1.msra.mxu0 0.0
  %103 = vmatprep.subr.mxu0 0.0
  %104 = vmatpush1.msra.mxu0 0.0
  %105 = vmatprep.subr.mxu0 0.0
  %106 = vmatpush1.msra.mxu0 0.0
  %107 = vmatprep.subr.mxu0 0.0
  %108 = vmatpush1.msra.mxu0 0.0
  %109 = vmatprep.subr.mxu0 0.0
  %110 = vmatpush1.msra.mxu0 0.0
  %111 = vmatprep.subr.mxu0 0.0
  %112 = vmatpush1.msra.mxu0 0.0
  %113 = vmatprep.subr.mxu0 0.0
  %114 = vmatpush1.msra.mxu0 0.0
  %115 = vmatprep.subr.mxu0 0.0
  %116 = vmatpush1.msra.mxu0 0.0
  %117 = vmatprep.subr.mxu0 0.0
  %118 = vmatpush1.msra.mxu0 0.0
  %119 = vmatprep.subr.mxu0 0.0
  %120 = vmatpush1.msra.mxu0 0.0
  %121 = vmatprep.subr.mxu0 0.0
  %122 = vmatpush1.msra.mxu0 0.0
  %123 = vmatprep.subr.mxu0 0.0
  %124 = vmatpush1.msra.mxu0 0.0
  %125 = vmatprep.subr.mxu0 0.0
  %126 = vmatpush1.msra.mxu0 0.0
  %127 = vmatprep.subr.mxu0 0.0
  %128 = vmatpush1.msra.mxu0 0.0
  %129 = vmatprep.subr.mxu0 0.0
  %130 = vmatpush1.msra.mxu0 0.0
  %131 = vmatprep.subr.mxu0 0.0
  %132 = vmatpush1.msra.mxu0 0.0
  %133 = vmatprep.mubr.f32.mxu0 0.0
  %v134 = vand.u32 %v57, 4294901760
  %v135 = vsub.f32 %v57, %v134
  %v136 = vand.u32 %v135, 4294901760
  %v137 = vsub.f32 %v135, %v136
  %v138 = vand.u32 %v137, 4294901760
  %139 = vmatmul.mubr.f32.gmra.mrb[0].mxu0 %v138
  %v140 = vpop.f32.mrb[0].mxu0
  %v141 = vadd.f32 %v38, %v140
  %v142 = vpop.f32.mrb[0].mxu0
  %143 = vmatprep.mubr.f32.mxu0 0.0
  %v144 = vand.u32 %v60, 4294901760
  %v145 = vsub.f32 %v60, %v144
  %v146 = vand.u32 %v145, 4294901760
  %v147 = vsub.f32 %v145, %v146
  %v148 = vand.u32 %v147, 4294901760
  %149 = vmatmul.mubr.f32.gmra.mrb[0].mxu0 %v148
  %v150 = vpop.f32.mrb[0].mxu0
  %v151 = vadd.f32 %v43, %v150
  %v152 = vpop.f32.mrb[0].mxu0
  %153 = vmatprep.mubr.f32.mxu0 0.0
  %v154 = vand.u32 %v63, 4294901760
  %v155 = vsub.f32 %v63, %v154
  %v156 = vand.u32 %v155, 4294901760
  %v157 = vsub.f32 %v155, %v156
  %v158 = vand.u32 %v157, 4294901760
  %159 = vmatmul.mubr.f32.gmra.mrb[0].mxu0 %v158
  %v160 = vpop.f32.mrb[0].mxu0
  %v161 = vadd.f32 %v48, %v160
  %v162 = vpop.f32.mrb[0].mxu0
  %163 = vmatprep.mubr.f32.mxu0 0.0
  %v164 = vand.u32 %v66, 4294901760
  %v165 = vsub.f32 %v66, %v164
  %v166 = vand.u32 %v165, 4294901760
  %v167 = vsub.f32 %v165, %v166
  %v168 = vand.u32 %v167, 4294901760
  %169 = vmatmul.mubr.f32.gmra.mrb[0].mxu0 %v168
  %v170 = vpop.f32.mrb[0].mxu0
  %v171 = vadd.f32 %v53, %v170
  %v172 = vpop.f32.mrb[0].mxu0
  %173 = vdwg.mxu0
  %174 = vmatprep.subr.mxu0 0.0
  %v175 = vand.u32 %v26, 4294901760
  %v176 = vsub.f32 %v26, %v175
  %v177 = vand.u32 %v176, 4294901760
  %v178 = vsub.f32 %v176, %v177
  %v179 = vand.u32 %v178, 4294901760
  %180 = vmatpush1.msra.mxu0 %v179
  %181 = vmatprep.subr.mxu0 0.0
  %182 = vmatpush1.msra.mxu0 0.0
  %183 = vmatprep.subr.mxu0 0.0
  %184 = vmatpush1.msra.mxu0 0.0
  %185 = vmatprep.subr.mxu0 0.0
  %186 = vmatpush1.msra.mxu0 0.0
  %187 = vmatprep.subr.mxu0 0.0
  %188 = vmatpush1.msra.mxu0 0.0
  %189 = vmatprep.subr.mxu0 0.0
  %190 = vmatpush1.msra.mxu0 0.0
  %191 = vmatprep.subr.mxu0 0.0
  %192 = vmatpush1.msra.mxu0 0.0
  %193 = vmatprep.subr.mxu0 0.0
  %194 = vmatpush1.msra.mxu0 0.0
  %195 = vmatprep.subr.mxu0 0.0
  %196 = vmatpush1.msra.mxu0 0.0
  %197 = vmatprep.subr.mxu0 0.0
  %198 = vmatpush1.msra.mxu0 0.0
  %199 = vmatprep.subr.mxu0 0.0
  %200 = vmatpush1.msra.mxu0 0.0
  %201 = vmatprep.subr.mxu0 0.0
  %202 = vmatpush1.msra.mxu0 0.0
  %203 = vmatprep.subr.mxu0 0.0
  %204 = vmatpush1.msra.mxu0 0.0
  %205 = vmatprep.subr.mxu0 0.0
  %206 = vmatpush1.msra.mxu0 0.0
  %207 = vmatprep.subr.mxu0 0.0
  %208 = vmatpush1.msra.mxu0 0.0
  %209 = vmatprep.subr.mxu0 0.0
  %210 = vmatpush1.msra.mxu0 0.0
  %211 = vmatprep.subr.mxu0 0.0
  %212 = vmatpush1.msra.mxu0 0.0
  %213 = vmatprep.subr.mxu0 0.0
  %214 = vmatpush1.msra.mxu0 0.0
  %215 = vmatprep.subr.mxu0 0.0
  %216 = vmatpush1.msra.mxu0 0.0
  %217 = vmatprep.subr.mxu0 0.0
  %218 = vmatpush1.msra.mxu0 0.0
  %219 = vmatprep.subr.mxu0 0.0
  %220 = vmatpush1.msra.mxu0 0.0
  %221 = vmatprep.subr.mxu0 0.0
  %222 = vmatpush1.msra.mxu0 0.0
  %223 = vmatprep.subr.mxu0 0.0
  %224 = vmatpush1.msra.mxu0 0.0
  %225 = vmatprep.subr.mxu0 0.0
  %226 = vmatpush1.msra.mxu0 0.0
  %227 = vmatprep.subr.mxu0 0.0
  %228 = vmatpush1.msra.mxu0 0.0
  %229 = vmatprep.subr.mxu0 0.0
  %230 = vmatpush1.msra.mxu0 0.0
  %231 = vmatprep.subr.mxu0 0.0
  %232 = vmatpush1.msra.mxu0 0.0
  %233 = vmatprep.subr.mxu0 0.0
  %234 = vmatpush1.msra.mxu0 0.0
  %235 = vmatprep.subr.mxu0 0.0
  %236 = vmatpush1.msra.mxu0 0.0
  %237 = vmatprep.subr.mxu0 0.0
  %238 = vmatpush1.msra.mxu0 0.0
  %239 = vmatprep.subr.mxu0 0.0
  %240 = vmatpush1.msra.mxu0 0.0
  %241 = vmatprep.subr.mxu0 0.0
  %242 = vmatpush1.msra.mxu0 0.0
  %243 = vmatprep.mubr.f32.mxu0 0.0
  %v244 = vand.u32 %v57, 4294901760
  %245 = vmatmul.mubr.f32.gmra.mrb[0].mxu0 %v244
  %v246 = vpop.f32.mrb[0].mxu0
  %v247 = vadd.f32 %v141, %v246
  %v248 = vpop.f32.mrb[0].mxu0
  %249 = vmatprep.mubr.f32.mxu0 0.0
  %v250 = vand.u32 %v60, 4294901760
  %251 = vmatmul.mubr.f32.gmra.mrb[0].mxu0 %v250
  %v252 = vpop.f32.mrb[0].mxu0
  %v253 = vadd.f32 %v151, %v252
  %v254 = vpop.f32.mrb[0].mxu0
  %255 = vmatprep.mubr.f32.mxu0 0.0
  %v256 = vand.u32 %v63, 4294901760
  %257 = vmatmul.mubr.f32.gmra.mrb[0].mxu0 %v256
  %v258 = vpop.f32.mrb[0].mxu0
  %v259 = vadd.f32 %v161, %v258
  %v260 = vpop.f32.mrb[0].mxu0
  %261 = vmatprep.mubr.f32.mxu0 0.0
  %v262 = vand.u32 %v66, 4294901760
  %263 = vmatmul.mubr.f32.gmra.mrb[0].mxu0 %v262
  %v264 = vpop.f32.mrb[0].mxu0
  %v265 = vadd.f32 %v171, %v264
  %v266 = vpop.f32.mrb[0].mxu0
  %267 = vdwg.mxu0
  %268 = vmatprep.subr.mxu0 0.0
  %v269 = vand.u32 %v26, 4294901760
  %v270 = vsub.f32 %v26, %v269
  %271 = vmatpush1.msra.mxu0 %v270
  %272 = vmatprep.subr.mxu0 0.0
  %273 = vmatpush1.msra.mxu0 0.0
  %274 = vmatprep.subr.mxu0 0.0
  %275 = vmatpush1.msra.mxu0 0.0
  %276 = vmatprep.subr.mxu0 0.0
  %277 = vmatpush1.msra.mxu0 0.0
  %278 = vmatprep.subr.mxu0 0.0
  %279 = vmatpush1.msra.mxu0 0.0
  %280 = vmatprep.subr.mxu0 0.0
  %281 = vmatpush1.msra.mxu0 0.0
  %282 = vmatprep.subr.mxu0 0.0
  %283 = vmatpush1.msra.mxu0 0.0
  %284 = vmatprep.subr.mxu0 0.0
  %285 = vmatpush1.msra.mxu0 0.0
  %286 = vmatprep.subr.mxu0 0.0
  %287 = vmatpush1.msra.mxu0 0.0
  %288 = vmatprep.subr.mxu0 0.0
  %289 = vmatpush1.msra.mxu0 0.0
  %290 = vmatprep.subr.mxu0 0.0
  %291 = vmatpush1.msra.mxu0 0.0
  %292 = vmatprep.subr.mxu0 0.0
  %293 = vmatpush1.msra.mxu0 0.0
  %294 = vmatprep.subr.mxu0 0.0
  %295 = vmatpush1.msra.mxu0 0.0
  %296 = vmatprep.subr.mxu0 0.0
  %297 = vmatpush1.msra.mxu0 0.0
  %298 = vmatprep.subr.mxu0 0.0
  %299 = vmatpush1.msra.mxu0 0.0
  %300 = vmatprep.subr.mxu0 0.0
  %301 = vmatpush1.msra.mxu0 0.0
  %302 = vmatprep.subr.mxu0 0.0
  %303 = vmatpush1.msra.mxu0 0.0
  %304 = vmatprep.subr.mxu0 0.0
  %305 = vmatpush1.msra.mxu0 0.0
  %306 = vmatprep.subr.mxu0 0.0
  %307 = vmatpush1.msra.mxu0 0.0
  %308 = vmatprep.subr.mxu0 0.0
  %309 = vmatpush1.msra.mxu0 0.0
  %310 = vmatprep.subr.mxu0 0.0
  %311 = vmatpush1.msra.mxu0 0.0
  %312 = vmatprep.subr.mxu0 0.0
  %313 = vmatpush1.msra.mxu0 0.0
  %314 = vmatprep.subr.mxu0 0.0
  %315 = vmatpush1.msra.mxu0 0.0
  %316 = vmatprep.subr.mxu0 0.0
  %317 = vmatpush1.msra.mxu0 0.0
  %318 = vmatprep.subr.mxu0 0.0
  %319 = vmatpush1.msra.mxu0 0.0
  %320 = vmatprep.subr.mxu0 0.0
  %321 = vmatpush1.msra.mxu0 0.0
  %322 = vmatprep.subr.mxu0 0.0
  %323 = vmatpush1.msra.mxu0 0.0
  %324 = vmatprep.subr.mxu0 0.0
  %325 = vmatpush1.msra.mxu0 0.0
  %326 = vmatprep.subr.mxu0 0.0
  %327 = vmatpush1.msra.mxu0 0.0
  %328 = vmatprep.subr.mxu0 0.0
  %329 = vmatpush1.msra.mxu0 0.0
  %330 = vmatprep.subr.mxu0 0.0
  %331 = vmatpush1.msra.mxu0 0.0
  %332 = vmatprep.subr.mxu0 0.0
  %333 = vmatpush1.msra.mxu0 0.0
  %334 = vmatprep.mubr.f32.mxu0 0.0
  %v335 = vand.u32 %v57, 4294901760
  %v336 = vsub.f32 %v57, %v335
  %337 = vmatmul.mubr.f32.gmra.mrb[0].mxu0 %v336
  %v338 = vpop.f32.mrb[0].mxu0
  %v339 = vadd.f32 %v247, %v338
  %v340 = vpop.f32.mrb[0].mxu0
  %341 = vmatprep.mubr.f32.mxu0 0.0
  %v342 = vand.u32 %v60, 4294901760
  %v343 = vsub.f32 %v60, %v342
  %344 = vmatmul.mubr.f32.gmra.mrb[0].mxu0 %v343
  %v345 = vpop.f32.mrb[0].mxu0
  %v346 = vadd.f32 %v253, %v345
  %v347 = vpop.f32.mrb[0].mxu0
  %348 = vmatprep.mubr.f32.mxu0 0.0
  %v349 = vand.u32 %v63, 4294901760
  %v350 = vsub.f32 %v63, %v349
  %351 = vmatmul.mubr.f32.gmra.mrb[0].mxu0 %v350
  %v352 = vpop.f32.mrb[0].mxu0
  %v353 = vadd.f32 %v259, %v352
  %v354 = vpop.f32.mrb[0].mxu0
  %355 = vmatprep.mubr.f32.mxu0 0.0
  %v356 = vand.u32 %v66, 4294901760
  %v357 = vsub.f32 %v66, %v356
  %358 = vmatmul.mubr.f32.gmra.mrb[0].mxu0 %v357
  %v359 = vpop.f32.mrb[0].mxu0
  %v360 = vadd.f32 %v265, %v359
  %v361 = vpop.f32.mrb[0].mxu0
  %362 = vdwg.mxu0
  %363 = vmatprep.subr.mxu0 0.0
  %v364 = vand.u32 %v26, 4294901760
  %365 = vmatpush1.msra.mxu0 %v364
  %366 = vmatprep.subr.mxu0 0.0
  %367 = vmatpush1.msra.mxu0 0.0
  %368 = vmatprep.subr.mxu0 0.0
  %369 = vmatpush1.msra.mxu0 0.0
  %370 = vmatprep.subr.mxu0 0.0
  %371 = vmatpush1.msra.mxu0 0.0
  %372 = vmatprep.subr.mxu0 0.0
  %373 = vmatpush1.msra.mxu0 0.0
  %374 = vmatprep.subr.mxu0 0.0
  %375 = vmatpush1.msra.mxu0 0.0
  %376 = vmatprep.subr.mxu0 0.0
  %377 = vmatpush1.msra.mxu0 0.0
  %378 = vmatprep.subr.mxu0 0.0
  %379 = vmatpush1.msra.mxu0 0.0
  %380 = vmatprep.subr.mxu0 0.0
  %381 = vmatpush1.msra.mxu0 0.0
  %382 = vmatprep.subr.mxu0 0.0
  %383 = vmatpush1.msra.mxu0 0.0
  %384 = vmatprep.subr.mxu0 0.0
  %385 = vmatpush1.msra.mxu0 0.0
  %386 = vmatprep.subr.mxu0 0.0
  %387 = vmatpush1.msra.mxu0 0.0
  %388 = vmatprep.subr.mxu0 0.0
  %389 = vmatpush1.msra.mxu0 0.0
  %390 = vmatprep.subr.mxu0 0.0
  %391 = vmatpush1.msra.mxu0 0.0
  %392 = vmatprep.subr.mxu0 0.0
  %393 = vmatpush1.msra.mxu0 0.0
  %394 = vmatprep.subr.mxu0 0.0
  %395 = vmatpush1.msra.mxu0 0.0
  %396 = vmatprep.subr.mxu0 0.0
  %397 = vmatpush1.msra.mxu0 0.0
  %398 = vmatprep.subr.mxu0 0.0
  %399 = vmatpush1.msra.mxu0 0.0
  %400 = vmatprep.subr.mxu0 0.0
  %401 = vmatpush1.msra.mxu0 0.0
  %402 = vmatprep.subr.mxu0 0.0
  %403 = vmatpush1.msra.mxu0 0.0
  %404 = vmatprep.subr.mxu0 0.0
  %405 = vmatpush1.msra.mxu0 0.0
  %406 = vmatprep.subr.mxu0 0.0
  %407 = vmatpush1.msra.mxu0 0.0
  %408 = vmatprep.subr.mxu0 0.0
  %409 = vmatpush1.msra.mxu0 0.0
  %410 = vmatprep.subr.mxu0 0.0
  %411 = vmatpush1.msra.mxu0 0.0
  %412 = vmatprep.subr.mxu0 0.0
  %413 = vmatpush1.msra.mxu0 0.0
  %414 = vmatprep.subr.mxu0 0.0
  %415 = vmatpush1.msra.mxu0 0.0
  %416 = vmatprep.subr.mxu0 0.0
  %417 = vmatpush1.msra.mxu0 0.0
  %418 = vmatprep.subr.mxu0 0.0
  %419 = vmatpush1.msra.mxu0 0.0
  %420 = vmatprep.subr.mxu0 0.0
  %421 = vmatpush1.msra.mxu0 0.0
  %422 = vmatprep.subr.mxu0 0.0
  %423 = vmatpush1.msra.mxu0 0.0
  %424 = vmatprep.subr.mxu0 0.0
  %425 = vmatpush1.msra.mxu0 0.0
  %426 = vmatprep.subr.mxu0 0.0
  %427 = vmatpush1.msra.mxu0 0.0
  %428 = vmatprep.mubr.f32.mxu0 0.0
  %v429 = vand.u32 %v57, 4294901760
  %v430 = vsub.f32 %v57, %v429
  %v431 = vand.u32 %v430, 4294901760
  %432 = vmatmul.mubr.f32.gmra.mrb[0].mxu0 %v431
  %v433 = vpop.f32.mrb[0].mxu0
  %v434 = vadd.f32 %v339, %v433
  %v435 = vpop.f32.mrb[0].mxu0
  %436 = vmatprep.mubr.f32.mxu0 0.0
  %v437 = vand.u32 %v60, 4294901760
  %v438 = vsub.f32 %v60, %v437
  %v439 = vand.u32 %v438, 4294901760
  %440 = vmatmul.mubr.f32.gmra.mrb[0].mxu0 %v439
  %v441 = vpop.f32.mrb[0].mxu0
  %v442 = vadd.f32 %v346, %v441
  %v443 = vpop.f32.mrb[0].mxu0
  %444 = vmatprep.mubr.f32.mxu0 0.0
  %v445 = vand.u32 %v63, 4294901760
  %v446 = vsub.f32 %v63, %v445
  %v447 = vand.u32 %v446, 4294901760
  %448 = vmatmul.mubr.f32.gmra.mrb[0].mxu0 %v447
  %v449 = vpop.f32.mrb[0].mxu0
  %v450 = vadd.f32 %v353, %v449
  %v451 = vpop.f32.mrb[0].mxu0
  %452 = vmatprep.mubr.f32.mxu0 0.0
  %v453 = vand.u32 %v66, 4294901760
  %v454 = vsub.f32 %v66, %v453
  %v455 = vand.u32 %v454, 4294901760
  %456 = vmatmul.mubr.f32.gmra.mrb[0].mxu0 %v455
  %v457 = vpop.f32.mrb[0].mxu0
  %v458 = vadd.f32 %v360, %v457
  %v459 = vpop.f32.mrb[0].mxu0
  %460 = vdwg.mxu0
  %461 = vmatprep.subr.mxu0 0.0
  %v462 = vand.u32 %v26, 4294901760
  %v463 = vsub.f32 %v26, %v462
  %v464 = vand.u32 %v463, 4294901760
  %465 = vmatpush1.msra.mxu0 %v464
  %466 = vmatprep.subr.mxu0 0.0
  %467 = vmatpush1.msra.mxu0 0.0
  %468 = vmatprep.subr.mxu0 0.0
  %469 = vmatpush1.msra.mxu0 0.0
  %470 = vmatprep.subr.mxu0 0.0
  %471 = vmatpush1.msra.mxu0 0.0
  %472 = vmatprep.subr.mxu0 0.0
  %473 = vmatpush1.msra.mxu0 0.0
  %474 = vmatprep.subr.mxu0 0.0
  %475 = vmatpush1.msra.mxu0 0.0
  %476 = vmatprep.subr.mxu0 0.0
  %477 = vmatpush1.msra.mxu0 0.0
  %478 = vmatprep.subr.mxu0 0.0
  %479 = vmatpush1.msra.mxu0 0.0
  %480 = vmatprep.subr.mxu0 0.0
  %481 = vmatpush1.msra.mxu0 0.0
  %482 = vmatprep.subr.mxu0 0.0
  %483 = vmatpush1.msra.mxu0 0.0
  %484 = vmatprep.subr.mxu0 0.0
  %485 = vmatpush1.msra.mxu0 0.0
  %486 = vmatprep.subr.mxu0 0.0
  %487 = vmatpush1.msra.mxu0 0.0
  %488 = vmatprep.subr.mxu0 0.0
  %489 = vmatpush1.msra.mxu0 0.0
  %490 = vmatprep.subr.mxu0 0.0
  %491 = vmatpush1.msra.mxu0 0.0
  %492 = vmatprep.subr.mxu0 0.0
  %493 = vmatpush1.msra.mxu0 0.0
  %494 = vmatprep.subr.mxu0 0.0
  %495 = vmatpush1.msra.mxu0 0.0
  %496 = vmatprep.subr.mxu0 0.0
  %497 = vmatpush1.msra.mxu0 0.0
  %498 = vmatprep.subr.mxu0 0.0
  %499 = vmatpush1.msra.mxu0 0.0
  %500 = vmatprep.subr.mxu0 0.0
  %501 = vmatpush1.msra.mxu0 0.0
  %502 = vmatprep.subr.mxu0 0.0
  %503 = vmatpush1.msra.mxu0 0.0
  %504 = vmatprep.subr.mxu0 0.0
  %505 = vmatpush1.msra.mxu0 0.0
  %506 = vmatprep.subr.mxu0 0.0
  %507 = vmatpush1.msra.mxu0 0.0
  %508 = vmatprep.subr.mxu0 0.0
  %509 = vmatpush1.msra.mxu0 0.0
  %510 = vmatprep.subr.mxu0 0.0
  %511 = vmatpush1.msra.mxu0 0.0
  %512 = vmatprep.subr.mxu0 0.0
  %513 = vmatpush1.msra.mxu0 0.0
  %514 = vmatprep.subr.mxu0 0.0
  %515 = vmatpush1.msra.mxu0 0.0
  %516 = vmatprep.subr.mxu0 0.0
  %517 = vmatpush1.msra.mxu0 0.0
  %518 = vmatprep.subr.mxu0 0.0
  %519 = vmatpush1.msra.mxu0 0.0
  %520 = vmatprep.subr.mxu0 0.0
  %521 = vmatpush1.msra.mxu0 0.0
  %522 = vmatprep.subr.mxu0 0.0
  %523 = vmatpush1.msra.mxu0 0.0
  %524 = vmatprep.subr.mxu0 0.0
  %525 = vmatpush1.msra.mxu0 0.0
  %526 = vmatprep.subr.mxu0 0.0
  %527 = vmatpush1.msra.mxu0 0.0
  %528 = vmatprep.mubr.f32.mxu0 0.0
  %v529 = vand.u32 %v57, 4294901760
  %530 = vmatmul.mubr.f32.gmra.mrb[0].mxu0 %v529
  %v531 = vpop.f32.mrb[0].mxu0
  %v532 = vadd.f32 %v434, %v531
  %v533 = vpop.f32.mrb[0].mxu0
  %534 = vmatprep.mubr.f32.mxu0 0.0
  %v535 = vand.u32 %v60, 4294901760
  %536 = vmatmul.mubr.f32.gmra.mrb[0].mxu0 %v535
  %v537 = vpop.f32.mrb[0].mxu0
  %v538 = vadd.f32 %v442, %v537
  %v539 = vpop.f32.mrb[0].mxu0
  %540 = vmatprep.mubr.f32.mxu0 0.0
  %v541 = vand.u32 %v63, 4294901760
  %542 = vmatmul.mubr.f32.gmra.mrb[0].mxu0 %v541
  %v543 = vpop.f32.mrb[0].mxu0
  %v544 = vadd.f32 %v450, %v543
  %v545 = vpop.f32.mrb[0].mxu0
  %546 = vmatprep.mubr.f32.mxu0 0.0
  %v547 = vand.u32 %v66, 4294901760
  %548 = vmatmul.mubr.f32.gmra.mrb[0].mxu0 %v547
  %v549 = vpop.f32.mrb[0].mxu0
  %v550 = vadd.f32 %v458, %v549
  %v551 = vpop.f32.mrb[0].mxu0
  %552 = vdwg.mxu0
  %553 = vmatprep.subr.mxu0 0.0
  %v554 = vand.u32 %v26, 4294901760
  %555 = vmatpush1.msra.mxu0 %v554
  %556 = vmatprep.subr.mxu0 0.0
  %557 = vmatpush1.msra.mxu0 0.0
  %558 = vmatprep.subr.mxu0 0.0
  %559 = vmatpush1.msra.mxu0 0.0
  %560 = vmatprep.subr.mxu0 0.0
  %561 = vmatpush1.msra.mxu0 0.0
  %562 = vmatprep.subr.mxu0 0.0
  %563 = vmatpush1.msra.mxu0 0.0
  %564 = vmatprep.subr.mxu0 0.0
  %565 = vmatpush1.msra.mxu0 0.0
  %566 = vmatprep.subr.mxu0 0.0
  %567 = vmatpush1.msra.mxu0 0.0
  %568 = vmatprep.subr.mxu0 0.0
  %569 = vmatpush1.msra.mxu0 0.0
  %570 = vmatprep.subr.mxu0 0.0
  %571 = vmatpush1.msra.mxu0 0.0
  %572 = vmatprep.subr.mxu0 0.0
  %573 = vmatpush1.msra.mxu0 0.0
  %574 = vmatprep.subr.mxu0 0.0
  %575 = vmatpush1.msra.mxu0 0.0
  %576 = vmatprep.subr.mxu0 0.0
  %577 = vmatpush1.msra.mxu0 0.0
  %578 = vmatprep.subr.mxu0 0.0
  %579 = vmatpush1.msra.mxu0 0.0
  %580 = vmatprep.subr.mxu0 0.0
  %581 = vmatpush1.msra.mxu0 0.0
  %582 = vmatprep.subr.mxu0 0.0
  %583 = vmatpush1.msra.mxu0 0.0
  %584 = vmatprep.subr.mxu0 0.0
  %585 = vmatpush1.msra.mxu0 0.0
  %586 = vmatprep.subr.mxu0 0.0
  %587 = vmatpush1.msra.mxu0 0.0
  %588 = vmatprep.subr.mxu0 0.0
  %589 = vmatpush1.msra.mxu0 0.0
  %590 = vmatprep.subr.mxu0 0.0
  %591 = vmatpush1.msra.mxu0 0.0
  %592 = vmatprep.subr.mxu0 0.0
  %593 = vmatpush1.msra.mxu0 0.0
  %594 = vmatprep.subr.mxu0 0.0
  %595 = vmatpush1.msra.mxu0 0.0
  %596 = vmatprep.subr.mxu0 0.0
  %597 = vmatpush1.msra.mxu0 0.0
  %598 = vmatprep.subr.mxu0 0.0
  %599 = vmatpush1.msra.mxu0 0.0
  %600 = vmatprep.subr.mxu0 0.0
  %601 = vmatpush1.msra.mxu0 0.0
  %602 = vmatprep.subr.mxu0 0.0
  %603 = vmatpush1.msra.mxu0 0.0
  %604 = vmatprep.subr.mxu0 0.0
  %605 = vmatpush1.msra.mxu0 0.0
  %606 = vmatprep.subr.mxu0 0.0
  %607 = vmatpush1.msra.mxu0 0.0
  %608 = vmatprep.subr.mxu0 0.0
  %609 = vmatpush1.msra.mxu0 0.0
  %610 = vmatprep.subr.mxu0 0.0
  %611 = vmatpush1.msra.mxu0 0.0
  %612 = vmatprep.subr.mxu0 0.0
  %613 = vmatpush1.msra.mxu0 0.0
  %614 = vmatprep.subr.mxu0 0.0
  %615 = vmatpush1.msra.mxu0 0.0
  %616 = vmatprep.subr.mxu0 0.0
  %617 = vmatpush1.msra.mxu0 0.0
  %618 = vmatprep.mubr.f32.mxu0 0.0
  %v619 = vand.u32 %v57, 4294901760
  %620 = vmatmul.mubr.f32.gmra.mrb[0].mxu0 %v619
  %v621 = vpop.f32.mrb[0].mxu0
  %v622 = vadd.f32 %v532, %v621
  %v623 = vpop.f32.mrb[0].mxu0
  %624 = vmatprep.mubr.f32.mxu0 0.0
  %v625 = vand.u32 %v60, 4294901760
  %626 = vmatmul.mubr.f32.gmra.mrb[0].mxu0 %v625
  %v627 = vpop.f32.mrb[0].mxu0
  %v628 = vadd.f32 %v538, %v627
  %v629 = vpop.f32.mrb[0].mxu0
  %630 = vmatprep.mubr.f32.mxu0 0.0
  %v631 = vand.u32 %v63, 4294901760
  %632 = vmatmul.mubr.f32.gmra.mrb[0].mxu0 %v631
  %v633 = vpop.f32.mrb[0].mxu0
  %v634 = vadd.f32 %v544, %v633
  %v635 = vpop.f32.mrb[0].mxu0
  %636 = vmatprep.mubr.f32.mxu0 0.0
  %v637 = vand.u32 %v66, 4294901760
  %638 = vmatmul.mubr.f32.gmra.mrb[0].mxu0 %v637
  %v639 = vpop.f32.mrb[0].mxu0
  %v640 = vadd.f32 %v550, %v639
  %v641 = vpop.f32.mrb[0].mxu0
  %642 = vdwg.mxu0
  %v643 = vmax.f32 %v622, 0.0
  %v644 = vmax.f32 %v628, 0.0
  %v645 = vmax.f32 %v634, 0.0
  %v646 = vmax.f32 %v640, 0.0
  %v647 = vld [vmem:[%s3] sm:$0xff]
  %v648 = vld [vmem:[%s3 + $0x8] sm:$0xff]
  %v649 = vld [vmem:[%s3 + $0x10] sm:$0xff]
  %v650 = vld [vmem:[%s3 + $0x18] sm:$0xff]
  %v651 = vld [vmem:[%s4] sm:$0xff]
  %v652 = vld [vmem:[%s4 + $0x8] sm:$0xff]
  %v653 = vld [vmem:[%s4 + $0x10] sm:$0xff]
  %v654 = vld [vmem:[%s4 + $0x18] sm:$0xff]
  %656 = vset.pattern.permute.xlu0 0
  %657 = vperm.xlu0 %656, %v651
  %v658 = vpop.permute.xlu0 %657
  %661 = vset.pattern.permute.xlu0 0
  %662 = vperm.xlu0 %661, %v652
  %v663 = vpop.permute.xlu0 %662
  %666 = vset.pattern.permute.xlu0 0
  %667 = vperm.xlu0 %666, %v653
  %v668 = vpop.permute.xlu0 %667
  %671 = vset.pattern.permute.xlu0 0
  %672 = vperm.xlu0 %671, %v654
  %v673 = vpop.permute.xlu0 %672
  %vm675 = vcmask 261120
  %v677 = vsel %vm675, %v647, 0
  %v680 = vsel %vm675, %v648, 0
  %v683 = vsel %vm675, %v649, 0
  %v686 = vsel %vm675, %v650, 0
  %688 = vmatprep.subr.mxu0 0.0
  %v689 = vand.u32 %v643, 4294901760
  %690 = vmatpush1.msra.mxu0 %v689
  %691 = vmatprep.subr.mxu0 0.0
  %v692 = vand.u32 %v644, 4294901760
  %693 = vmatpush1.msra.mxu0 %v692
  %694 = vmatprep.subr.mxu0 0.0
  %v695 = vand.u32 %v645, 4294901760
  %696 = vmatpush1.msra.mxu0 %v695
  %697 = vmatprep.subr.mxu0 0.0
  %v698 = vand.u32 %v646, 4294901760
  %699 = vmatpush1.msra.mxu0 %v698
  %700 = vmatprep.subr.mxu0 0.0
  %701 = vmatpush1.msra.mxu0 0.0
  %702 = vmatprep.subr.mxu0 0.0
  %703 = vmatpush1.msra.mxu0 0.0
  %704 = vmatprep.subr.mxu0 0.0
  %705 = vmatpush1.msra.mxu0 0.0
  %706 = vmatprep.subr.mxu0 0.0
  %707 = vmatpush1.msra.mxu0 0.0
  %708 = vmatprep.subr.mxu0 0.0
  %709 = vmatpush1.msra.mxu0 0.0
  %710 = vmatprep.subr.mxu0 0.0
  %711 = vmatpush1.msra.mxu0 0.0
  %712 = vmatprep.subr.mxu0 0.0
  %713 = vmatpush1.msra.mxu0 0.0
  %714 = vmatprep.subr.mxu0 0.0
  %715 = vmatpush1.msra.mxu0 0.0
  %716 = vmatprep.subr.mxu0 0.0
  %717 = vmatpush1.msra.mxu0 0.0
  %718 = vmatprep.subr.mxu0 0.0
  %719 = vmatpush1.msra.mxu0 0.0
  %720 = vmatprep.subr.mxu0 0.0
  %721 = vmatpush1.msra.mxu0 0.0
  %722 = vmatprep.subr.mxu0 0.0
  %723 = vmatpush1.msra.mxu0 0.0
  %724 = vmatprep.subr.mxu0 0.0
  %725 = vmatpush1.msra.mxu0 0.0
  %726 = vmatprep.subr.mxu0 0.0
  %727 = vmatpush1.msra.mxu0 0.0
  %728 = vmatprep.subr.mxu0 0.0
  %729 = vmatpush1.msra.mxu0 0.0
  %730 = vmatprep.subr.mxu0 0.0
  %731 = vmatpush1.msra.mxu0 0.0
  %732 = vmatprep.subr.mxu0 0.0
  %733 = vmatpush1.msra.mxu0 0.0
  %734 = vmatprep.subr.mxu0 0.0
  %735 = vmatpush1.msra.mxu0 0.0
  %736 = vmatprep.subr.mxu0 0.0
  %737 = vmatpush1.msra.mxu0 0.0
  %738 = vmatprep.subr.mxu0 0.0
  %739 = vmatpush1.msra.mxu0 0.0
  %740 = vmatprep.subr.mxu0 0.0
  %741 = vmatpush1.msra.mxu0 0.0
  %742 = vmatprep.subr.mxu0 0.0
  %743 = vmatpush1.msra.mxu0 0.0
  %744 = vmatprep.subr.mxu0 0.0
  %745 = vmatpush1.msra.mxu0 0.0
  %746 = vmatprep.subr.mxu0 0.0
  %747 = vmatpush1.msra.mxu0 0.0
  %748 = vmatprep.subr.mxu0 0.0
  %749 = vmatpush1.msra.mxu0 0.0
  %750 = vmatprep.subr.mxu0 0.0
  %751 = vmatpush1.msra.mxu0 0.0
  %752 = vmatprep.subr.mxu0 0.0
  %753 = vmatpush1.msra.mxu0 0.0
  %754 = vmatprep.subr.mxu0 0.0
  %755 = vmatpush1.msra.mxu0 0.0
  %756 = vmatprep.mubr.f32.mxu0 0.0
  %v757 = vand.u32 %v677, 4294901760
  %v758 = vsub.f32 %v677, %v757
  %v759 = vand.u32 %v758, 4294901760
  %v760 = vsub.f32 %v758, %v759
  %v761 = vand.u32 %v760, 4294901760
  %762 = vmatmul.mubr.f32.gmra.mrb[0].mxu0 %v761
  %v763 = vpop.f32.mrb[0].mxu0
  %v764 = vadd.f32 %v658, %v763
  %v765 = vpop.f32.mrb[0].mxu0
  %766 = vmatprep.mubr.f32.mxu0 0.0
  %v767 = vand.u32 %v680, 4294901760
  %v768 = vsub.f32 %v680, %v767
  %v769 = vand.u32 %v768, 4294901760
  %v770 = vsub.f32 %v768, %v769
  %v771 = vand.u32 %v770, 4294901760
  %772 = vmatmul.mubr.f32.gmra.mrb[0].mxu0 %v771
  %v773 = vpop.f32.mrb[0].mxu0
  %v774 = vadd.f32 %v663, %v773
  %v775 = vpop.f32.mrb[0].mxu0
  %776 = vmatprep.mubr.f32.mxu0 0.0
  %v777 = vand.u32 %v683, 4294901760
  %v778 = vsub.f32 %v683, %v777
  %v779 = vand.u32 %v778, 4294901760
  %v780 = vsub.f32 %v778, %v779
  %v781 = vand.u32 %v780, 4294901760
  %782 = vmatmul.mubr.f32.gmra.mrb[0].mxu0 %v781
  %v783 = vpop.f32.mrb[0].mxu0
  %v784 = vadd.f32 %v668, %v783
  %v785 = vpop.f32.mrb[0].mxu0
  %786 = vmatprep.mubr.f32.mxu0 0.0
  %v787 = vand.u32 %v686, 4294901760
  %v788 = vsub.f32 %v686, %v787
  %v789 = vand.u32 %v788, 4294901760
  %v790 = vsub.f32 %v788, %v789
  %v791 = vand.u32 %v790, 4294901760
  %792 = vmatmul.mubr.f32.gmra.mrb[0].mxu0 %v791
  %v793 = vpop.f32.mrb[0].mxu0
  %v794 = vadd.f32 %v673, %v793
  %v795 = vpop.f32.mrb[0].mxu0
  %796 = vdwg.mxu0
  %797 = vmatprep.subr.mxu0 0.0
  %v798 = vand.u32 %v643, 4294901760
  %v799 = vsub.f32 %v643, %v798
  %v800 = vand.u32 %v799, 4294901760
  %v801 = vsub.f32 %v799, %v800
  %v802 = vand.u32 %v801, 4294901760
  %803 = vmatpush1.msra.mxu0 %v802
  %804 = vmatprep.subr.mxu0 0.0
  %v805 = vand.u32 %v644, 4294901760
  %v806 = vsub.f32 %v644, %v805
  %v807 = vand.u32 %v806, 4294901760
  %v808 = vsub.f32 %v806, %v807
  %v809 = vand.u32 %v808, 4294901760
  %810 = vmatpush1.msra.mxu0 %v809
  %811 = vmatprep.subr.mxu0 0.0
  %v812 = vand.u32 %v645, 4294901760
  %v813 = vsub.f32 %v645, %v812
  %v814 = vand.u32 %v813, 4294901760
  %v815 = vsub.f32 %v813, %v814
  %v816 = vand.u32 %v815, 4294901760
  %817 = vmatpush1.msra.mxu0 %v816
  %818 = vmatprep.subr.mxu0 0.0
  %v819 = vand.u32 %v646, 4294901760
  %v820 = vsub.f32 %v646, %v819
  %v821 = vand.u32 %v820, 4294901760
  %v822 = vsub.f32 %v820, %v821
  %v823 = vand.u32 %v822, 4294901760
  %824 = vmatpush1.msra.mxu0 %v823
  %825 = vmatprep.subr.mxu0 0.0
  %826 = vmatpush1.msra.mxu0 0.0
  %827 = vmatprep.subr.mxu0 0.0
  %828 = vmatpush1.msra.mxu0 0.0
  %829 = vmatprep.subr.mxu0 0.0
  %830 = vmatpush1.msra.mxu0 0.0
  %831 = vmatprep.subr.mxu0 0.0
  %832 = vmatpush1.msra.mxu0 0.0
  %833 = vmatprep.subr.mxu0 0.0
  %834 = vmatpush1.msra.mxu0 0.0
  %835 = vmatprep.subr.mxu0 0.0
  %836 = vmatpush1.msra.mxu0 0.0
  %837 = vmatprep.subr.mxu0 0.0
  %838 = vmatpush1.msra.mxu0 0.0
  %839 = vmatprep.subr.mxu0 0.0
  %840 = vmatpush1.msra.mxu0 0.0
  %841 = vmatprep.subr.mxu0 0.0
  %842 = vmatpush1.msra.mxu0 0.0
  %843 = vmatprep.subr.mxu0 0.0
  %844 = vmatpush1.msra.mxu0 0.0
  %845 = vmatprep.subr.mxu0 0.0
  %846 = vmatpush1.msra.mxu0 0.0
  %847 = vmatprep.subr.mxu0 0.0
  %848 = vmatpush1.msra.mxu0 0.0
  %849 = vmatprep.subr.mxu0 0.0
  %850 = vmatpush1.msra.mxu0 0.0
  %851 = vmatprep.subr.mxu0 0.0
  %852 = vmatpush1.msra.mxu0 0.0
  %853 = vmatprep.subr.mxu0 0.0
  %854 = vmatpush1.msra.mxu0 0.0
  %855 = vmatprep.subr.mxu0 0.0
  %856 = vmatpush1.msra.mxu0 0.0
  %857 = vmatprep.subr.mxu0 0.0
  %858 = vmatpush1.msra.mxu0 0.0
  %859 = vmatprep.subr.mxu0 0.0
  %860 = vmatpush1.msra.mxu0 0.0
  %861 = vmatprep.subr.mxu0 0.0
  %862 = vmatpush1.msra.mxu0 0.0
  %863 = vmatprep.subr.mxu0 0.0
  %864 = vmatpush1.msra.mxu0 0.0
  %865 = vmatprep.subr.mxu0 0.0
  %866 = vmatpush1.msra.mxu0 0.0
  %867 = vmatprep.subr.mxu0 0.0
  %868 = vmatpush1.msra.mxu0 0.0
  %869 = vmatprep.subr.mxu0 0.0
  %870 = vmatpush1.msra.mxu0 0.0
  %871 = vmatprep.subr.mxu0 0.0
  %872 = vmatpush1.msra.mxu0 0.0
  %873 = vmatprep.subr.mxu0 0.0
  %874 = vmatpush1.msra.mxu0 0.0
  %875 = vmatprep.subr.mxu0 0.0
  %876 = vmatpush1.msra.mxu0 0.0
  %877 = vmatprep.subr.mxu0 0.0
  %878 = vmatpush1.msra.mxu0 0.0
  %879 = vmatprep.subr.mxu0 0.0
  %880 = vmatpush1.msra.mxu0 0.0
  %881 = vmatprep.mubr.f32.mxu0 0.0
  %v882 = vand.u32 %v677, 4294901760
  %883 = vmatmul.mubr.f32.gmra.mrb[0].mxu0 %v882
  %v884 = vpop.f32.mrb[0].mxu0
  %v885 = vadd.f32 %v764, %v884
  %v886 = vpop.f32.mrb[0].mxu0
  %887 = vmatprep.mubr.f32.mxu0 0.0
  %v888 = vand.u32 %v680, 4294901760
  %889 = vmatmul.mubr.f32.gmra.mrb[0].mxu0 %v888
  %v890 = vpop.f32.mrb[0].mxu0
  %v891 = vadd.f32 %v774, %v890
  %v892 = vpop.f32.mrb[0].mxu0
  %893 = vmatprep.mubr.f32.mxu0 0.0
  %v894 = vand.u32 %v683, 4294901760
  %895 = vmatmul.mubr.f32.gmra.mrb[0].mxu0 %v894
  %v896 = vpop.f32.mrb[0].mxu0
  %v897 = vadd.f32 %v784, %v896
  %v898 = vpop.f32.mrb[0].mxu0
  %899 = vmatprep.mubr.f32.mxu0 0.0
  %v900 = vand.u32 %v686, 4294901760
  %901 = vmatmul.mubr.f32.gmra.mrb[0].mxu0 %v900
  %v902 = vpop.f32.mrb[0].mxu0
  %v903 = vadd.f32 %v794, %v902
  %v904 = vpop.f32.mrb[0].mxu0
  %905 = vdwg.mxu0
  %906 = vmatprep.subr.mxu0 0.0
  %v907 = vand.u32 %v643, 4294901760
  %v908 = vsub.f32 %v643, %v907
  %909 = vmatpush1.msra.mxu0 %v908
  %910 = vmatprep.subr.mxu0 0.0
  %v911 = vand.u32 %v644, 4294901760
  %v912 = vsub.f32 %v644, %v911
  %913 = vmatpush1.msra.mxu0 %v912
  %914 = vmatprep.subr.mxu0 0.0
  %v915 = vand.u32 %v645, 4294901760
  %v916 = vsub.f32 %v645, %v915
  %917 = vmatpush1.msra.mxu0 %v916
  %918 = vmatprep.subr.mxu0 0.0
  %v919 = vand.u32 %v646, 4294901760
  %v920 = vsub.f32 %v646, %v919
  %921 = vmatpush1.msra.mxu0 %v920
  %922 = vmatprep.subr.mxu0 0.0
  %923 = vmatpush1.msra.mxu0 0.0
  %924 = vmatprep.subr.mxu0 0.0
  %925 = vmatpush1.msra.mxu0 0.0
  %926 = vmatprep.subr.mxu0 0.0
  %927 = vmatpush1.msra.mxu0 0.0
  %928 = vmatprep.subr.mxu0 0.0
  %929 = vmatpush1.msra.mxu0 0.0
  %930 = vmatprep.subr.mxu0 0.0
  %931 = vmatpush1.msra.mxu0 0.0
  %932 = vmatprep.subr.mxu0 0.0
  %933 = vmatpush1.msra.mxu0 0.0
  %934 = vmatprep.subr.mxu0 0.0
  %935 = vmatpush1.msra.mxu0 0.0
  %936 = vmatprep.subr.mxu0 0.0
  %937 = vmatpush1.msra.mxu0 0.0
  %938 = vmatprep.subr.mxu0 0.0
  %939 = vmatpush1.msra.mxu0 0.0
  %940 = vmatprep.subr.mxu0 0.0
  %941 = vmatpush1.msra.mxu0 0.0
  %942 = vmatprep.subr.mxu0 0.0
  %943 = vmatpush1.msra.mxu0 0.0
  %944 = vmatprep.subr.mxu0 0.0
  %945 = vmatpush1.msra.mxu0 0.0
  %946 = vmatprep.subr.mxu0 0.0
  %947 = vmatpush1.msra.mxu0 0.0
  %948 = vmatprep.subr.mxu0 0.0
  %949 = vmatpush1.msra.mxu0 0.0
  %950 = vmatprep.subr.mxu0 0.0
  %951 = vmatpush1.msra.mxu0 0.0
  %952 = vmatprep.subr.mxu0 0.0
  %953 = vmatpush1.msra.mxu0 0.0
  %954 = vmatprep.subr.mxu0 0.0
  %955 = vmatpush1.msra.mxu0 0.0
  %956 = vmatprep.subr.mxu0 0.0
  %957 = vmatpush1.msra.mxu0 0.0
  %958 = vmatprep.subr.mxu0 0.0
  %959 = vmatpush1.msra.mxu0 0.0
  %960 = vmatprep.subr.mxu0 0.0
  %961 = vmatpush1.msra.mxu0 0.0
  %962 = vmatprep.subr.mxu0 0.0
  %963 = vmatpush1.msra.mxu0 0.0
  %964 = vmatprep.subr.mxu0 0.0
  %965 = vmatpush1.msra.mxu0 0.0
  %966 = vmatprep.subr.mxu0 0.0
  %967 = vmatpush1.msra.mxu0 0.0
  %968 = vmatprep.subr.mxu0 0.0
  %969 = vmatpush1.msra.mxu0 0.0
  %970 = vmatprep.subr.mxu0 0.0
  %971 = vmatpush1.msra.mxu0 0.0
  %972 = vmatprep.subr.mxu0 0.0
  %973 = vmatpush1.msra.mxu0 0.0
  %974 = vmatprep.subr.mxu0 0.0
  %975 = vmatpush1.msra.mxu0 0.0
  %976 = vmatprep.subr.mxu0 0.0
  %977 = vmatpush1.msra.mxu0 0.0
  %978 = vmatprep.mubr.f32.mxu0 0.0
  %v979 = vand.u32 %v677, 4294901760
  %v980 = vsub.f32 %v677, %v979
  %981 = vmatmul.mubr.f32.gmra.mrb[0].mxu0 %v980
  %v982 = vpop.f32.mrb[0].mxu0
  %v983 = vadd.f32 %v885, %v982
  %v984 = vpop.f32.mrb[0].mxu0
  %985 = vmatprep.mubr.f32.mxu0 0.0
  %v986 = vand.u32 %v680, 4294901760
  %v987 = vsub.f32 %v680, %v986
  %988 = vmatmul.mubr.f32.gmra.mrb[0].mxu0 %v987
  %v989 = vpop.f32.mrb[0].mxu0
  %v990 = vadd.f32 %v891, %v989
  %v991 = vpop.f32.mrb[0].mxu0
  %992 = vmatprep.mubr.f32.mxu0 0.0
  %v993 = vand.u32 %v683, 4294901760
  %v994 = vsub.f32 %v683, %v993
  %995 = vmatmul.mubr.f32.gmra.mrb[0].mxu0 %v994
  %v996 = vpop.f32.mrb[0].mxu0
  %v997 = vadd.f32 %v897, %v996
  %v998 = vpop.f32.mrb[0].mxu0
  %999 = vmatprep.mubr.f32.mxu0 0.0
  %v1000 = vand.u32 %v686, 4294901760
  %v1001 = vsub.f32 %v686, %v1000
  %1002 = vmatmul.mubr.f32.gmra.mrb[0].mxu0 %v1001
  %v1003 = vpop.f32.mrb[0].mxu0
  %v1004 = vadd.f32 %v903, %v1003
  %v1005 = vpop.f32.mrb[0].mxu0
  %1006 = vdwg.mxu0
  %1007 = vmatprep.subr.mxu0 0.0
  %v1008 = vand.u32 %v643, 4294901760
  %1009 = vmatpush1.msra.mxu0 %v1008
  %1010 = vmatprep.subr.mxu0 0.0
  %v1011 = vand.u32 %v644, 4294901760
  %1012 = vmatpush1.msra.mxu0 %v1011
  %1013 = vmatprep.subr.mxu0 0.0
  %v1014 = vand.u32 %v645, 4294901760
  %1015 = vmatpush1.msra.mxu0 %v1014
  %1016 = vmatprep.subr.mxu0 0.0
  %v1017 = vand.u32 %v646, 4294901760
  %1018 = vmatpush1.msra.mxu0 %v1017
  %1019 = vmatprep.subr.mxu0 0.0
  %1020 = vmatpush1.msra.mxu0 0.0
  %1021 = vmatprep.subr.mxu0 0.0
  %1022 = vmatpush1.msra.mxu0 0.0
  %1023 = vmatprep.subr.mxu0 0.0
  %1024 = vmatpush1.msra.mxu0 0.0
  %1025 = vmatprep.subr.mxu0 0.0
  %1026 = vmatpush1.msra.mxu0 0.0
  %1027 = vmatprep.subr.mxu0 0.0
  %1028 = vmatpush1.msra.mxu0 0.0
  %1029 = vmatprep.subr.mxu0 0.0
  %1030 = vmatpush1.msra.mxu0 0.0
  %1031 = vmatprep.subr.mxu0 0.0
  %1032 = vmatpush1.msra.mxu0 0.0
  %1033 = vmatprep.subr.mxu0 0.0
  %1034 = vmatpush1.msra.mxu0 0.0
  %1035 = vmatprep.subr.mxu0 0.0
  %1036 = vmatpush1.msra.mxu0 0.0
  %1037 = vmatprep.subr.mxu0 0.0
  %1038 = vmatpush1.msra.mxu0 0.0
  %1039 = vmatprep.subr.mxu0 0.0
  %1040 = vmatpush1.msra.mxu0 0.0
  %1041 = vmatprep.subr.mxu0 0.0
  %1042 = vmatpush1.msra.mxu0 0.0
  %1043 = vmatprep.subr.mxu0 0.0
  %1044 = vmatpush1.msra.mxu0 0.0
  %1045 = vmatprep.subr.mxu0 0.0
  %1046 = vmatpush1.msra.mxu0 0.0
  %1047 = vmatprep.subr.mxu0 0.0
  %1048 = vmatpush1.msra.mxu0 0.0
  %1049 = vmatprep.subr.mxu0 0.0
  %1050 = vmatpush1.msra.mxu0 0.0
  %1051 = vmatprep.subr.mxu0 0.0
  %1052 = vmatpush1.msra.mxu0 0.0
  %1053 = vmatprep.subr.mxu0 0.0
  %1054 = vmatpush1.msra.mxu0 0.0
  %1055 = vmatprep.subr.mxu0 0.0
  %1056 = vmatpush1.msra.mxu0 0.0
  %1057 = vmatprep.subr.mxu0 0.0
  %1058 = vmatpush1.msra.mxu0 0.0
  %1059 = vmatprep.subr.mxu0 0.0
  %1060 = vmatpush1.msra.mxu0 0.0
  %1061 = vmatprep.subr.mxu0 0.0
  %1062 = vmatpush1.msra.mxu0 0.0
  %1063 = vmatprep.subr.mxu0 0.0
  %1064 = vmatpush1.msra.mxu0 0.0
  %1065 = vmatprep.subr.mxu0 0.0
  %1066 = vmatpush1.msra.mxu0 0.0
  %1067 = vmatprep.subr.mxu0 0.0
  %1068 = vmatpush1.msra.mxu0 0.0
  %1069 = vmatprep.subr.mxu0 0.0
  %1070 = vmatpush1.msra.mxu0 0.0
  %1071 = vmatprep.subr.mxu0 0.0
  %1072 = vmatpush1.msra.mxu0 0.0
  %1073 = vmatprep.subr.mxu0 0.0
  %1074 = vmatpush1.msra.mxu0 0.0
  %1075 = vmatprep.mubr.f32.mxu0 0.0
  %v1076 = vand.u32 %v677, 4294901760
  %v1077 = vsub.f32 %v677, %v1076
  %v1078 = vand.u32 %v1077, 4294901760
  %1079 = vmatmul.mubr.f32.gmra.mrb[0].mxu0 %v1078
  %v1080 = vpop.f32.mrb[0].mxu0
  %v1081 = vadd.f32 %v983, %v1080
  %v1082 = vpop.f32.mrb[0].mxu0
  %1083 = vmatprep.mubr.f32.mxu0 0.0
  %v1084 = vand.u32 %v680, 4294901760
  %v1085 = vsub.f32 %v680, %v1084
  %v1086 = vand.u32 %v1085, 4294901760
  %1087 = vmatmul.mubr.f32.gmra.mrb[0].mxu0 %v1086
  %v1088 = vpop.f32.mrb[0].mxu0
  %v1089 = vadd.f32 %v990, %v1088
  %v1090 = vpop.f32.mrb[0].mxu0
  %1091 = vmatprep.mubr.f32.mxu0 0.0
  %v1092 = vand.u32 %v683, 4294901760
  %v1093 = vsub.f32 %v683, %v1092
  %v1094 = vand.u32 %v1093, 4294901760
  %1095 = vmatmul.mubr.f32.gmra.mrb[0].mxu0 %v1094
  %v1096 = vpop.f32.mrb[0].mxu0
  %v1097 = vadd.f32 %v997, %v1096
  %v1098 = vpop.f32.mrb[0].mxu0
  %1099 = vmatprep.mubr.f32.mxu0 0.0
  %v1100 = vand.u32 %v686, 4294901760
  %v1101 = vsub.f32 %v686, %v1100
  %v1102 = vand.u32 %v1101, 4294901760
  %1103 = vmatmul.mubr.f32.gmra.mrb[0].mxu0 %v1102
  %v1104 = vpop.f32.mrb[0].mxu0
  %v1105 = vadd.f32 %v1004, %v1104
  %v1106 = vpop.f32.mrb[0].mxu0
  %1107 = vdwg.mxu0
  %1108 = vmatprep.subr.mxu0 0.0
  %v1109 = vand.u32 %v643, 4294901760
  %v1110 = vsub.f32 %v643, %v1109
  %v1111 = vand.u32 %v1110, 4294901760
  %1112 = vmatpush1.msra.mxu0 %v1111
  %1113 = vmatprep.subr.mxu0 0.0
  %v1114 = vand.u32 %v644, 4294901760
  %v1115 = vsub.f32 %v644, %v1114
  %v1116 = vand.u32 %v1115, 4294901760
  %1117 = vmatpush1.msra.mxu0 %v1116
  %1118 = vmatprep.subr.mxu0 0.0
  %v1119 = vand.u32 %v645, 4294901760
  %v1120 = vsub.f32 %v645, %v1119
  %v1121 = vand.u32 %v1120, 4294901760
  %1122 = vmatpush1.msra.mxu0 %v1121
  %1123 = vmatprep.subr.mxu0 0.0
  %v1124 = vand.u32 %v646, 4294901760
  %v1125 = vsub.f32 %v646, %v1124
  %v1126 = vand.u32 %v1125, 4294901760
  %1127 = vmatpush1.msra.mxu0 %v1126
  %1128 = vmatprep.subr.mxu0 0.0
  %1129 = vmatpush1.msra.mxu0 0.0
  %1130 = vmatprep.subr.mxu0 0.0
  %1131 = vmatpush1.msra.mxu0 0.0
  %1132 = vmatprep.subr.mxu0 0.0
  %1133 = vmatpush1.msra.mxu0 0.0
  %1134 = vmatprep.subr.mxu0 0.0
  %1135 = vmatpush1.msra.mxu0 0.0
  %1136 = vmatprep.subr.mxu0 0.0
  %1137 = vmatpush1.msra.mxu0 0.0
  %1138 = vmatprep.subr.mxu0 0.0
  %1139 = vmatpush1.msra.mxu0 0.0
  %1140 = vmatprep.subr.mxu0 0.0
  %1141 = vmatpush1.msra.mxu0 0.0
  %1142 = vmatprep.subr.mxu0 0.0
  %1143 = vmatpush1.msra.mxu0 0.0
  %1144 = vmatprep.subr.mxu0 0.0
  %1145 = vmatpush1.msra.mxu0 0.0
  %1146 = vmatprep.subr.mxu0 0.0
  %1147 = vmatpush1.msra.mxu0 0.0
  %1148 = vmatprep.subr.mxu0 0.0
  %1149 = vmatpush1.msra.mxu0 0.0
  %1150 = vmatprep.subr.mxu0 0.0
  %1151 = vmatpush1.msra.mxu0 0.0
  %1152 = vmatprep.subr.mxu0 0.0
  %1153 = vmatpush1.msra.mxu0 0.0
  %1154 = vmatprep.subr.mxu0 0.0
  %1155 = vmatpush1.msra.mxu0 0.0
  %1156 = vmatprep.subr.mxu0 0.0
  %1157 = vmatpush1.msra.mxu0 0.0
  %1158 = vmatprep.subr.mxu0 0.0
  %1159 = vmatpush1.msra.mxu0 0.0
  %1160 = vmatprep.subr.mxu0 0.0
  %1161 = vmatpush1.msra.mxu0 0.0
  %1162 = vmatprep.subr.mxu0 0.0
  %1163 = vmatpush1.msra.mxu0 0.0
  %1164 = vmatprep.subr.mxu0 0.0
  %1165 = vmatpush1.msra.mxu0 0.0
  %1166 = vmatprep.subr.mxu0 0.0
  %1167 = vmatpush1.msra.mxu0 0.0
  %1168 = vmatprep.subr.mxu0 0.0
  %1169 = vmatpush1.msra.mxu0 0.0
  %1170 = vmatprep.subr.mxu0 0.0
  %1171 = vmatpush1.msra.mxu0 0.0
  %1172 = vmatprep.subr.mxu0 0.0
  %1173 = vmatpush1.msra.mxu0 0.0
  %1174 = vmatprep.subr.mxu0 0.0
  %1175 = vmatpush1.msra.mxu0 0.0
  %1176 = vmatprep.subr.mxu0 0.0
  %1177 = vmatpush1.msra.mxu0 0.0
  %1178 = vmatprep.subr.mxu0 0.0
  %1179 = vmatpush1.msra.mxu0 0.0
  %1180 = vmatprep.subr.mxu0 0.0
  %1181 = vmatpush1.msra.mxu0 0.0
  %1182 = vmatprep.subr.mxu0 0.0
  %1183 = vmatpush1.msra.mxu0 0.0
  %1184 = vmatprep.mubr.f32.mxu0 0.0
  %v1185 = vand.u32 %v677, 4294901760
  %1186 = vmatmul.mubr.f32.gmra.mrb[0].mxu0 %v1185
  %v1187 = vpop.f32.mrb[0].mxu0
  %v1188 = vadd.f32 %v1081, %v1187
  %v1189 = vpop.f32.mrb[0].mxu0
  %1190 = vmatprep.mubr.f32.mxu0 0.0
  %v1191 = vand.u32 %v680, 4294901760
  %1192 = vmatmul.mubr.f32.gmra.mrb[0].mxu0 %v1191
  %v1193 = vpop.f32.mrb[0].mxu0
  %v1194 = vadd.f32 %v1089, %v1193
  %v1195 = vpop.f32.mrb[0].mxu0
  %1196 = vmatprep.mubr.f32.mxu0 0.0
  %v1197 = vand.u32 %v683, 4294901760
  %1198 = vmatmul.mubr.f32.gmra.mrb[0].mxu0 %v1197
  %v1199 = vpop.f32.mrb[0].mxu0
  %v1200 = vadd.f32 %v1097, %v1199
  %v1201 = vpop.f32.mrb[0].mxu0
  %1202 = vmatprep.mubr.f32.mxu0 0.0
  %v1203 = vand.u32 %v686, 4294901760
  %1204 = vmatmul.mubr.f32.gmra.mrb[0].mxu0 %v1203
  %v1205 = vpop.f32.mrb[0].mxu0
  %v1206 = vadd.f32 %v1105, %v1205
  %v1207 = vpop.f32.mrb[0].mxu0
  %1208 = vdwg.mxu0
  %1209 = vmatprep.subr.mxu0 0.0
  %v1210 = vand.u32 %v643, 4294901760
  %1211 = vmatpush1.msra.mxu0 %v1210
  %1212 = vmatprep.subr.mxu0 0.0
  %v1213 = vand.u32 %v644, 4294901760
  %1214 = vmatpush1.msra.mxu0 %v1213
  %1215 = vmatprep.subr.mxu0 0.0
  %v1216 = vand.u32 %v645, 4294901760
  %1217 = vmatpush1.msra.mxu0 %v1216
  %1218 = vmatprep.subr.mxu0 0.0
  %v1219 = vand.u32 %v646, 4294901760
  %1220 = vmatpush1.msra.mxu0 %v1219
  %1221 = vmatprep.subr.mxu0 0.0
  %1222 = vmatpush1.msra.mxu0 0.0
  %1223 = vmatprep.subr.mxu0 0.0
  %1224 = vmatpush1.msra.mxu0 0.0
  %1225 = vmatprep.subr.mxu0 0.0
  %1226 = vmatpush1.msra.mxu0 0.0
  %1227 = vmatprep.subr.mxu0 0.0
  %1228 = vmatpush1.msra.mxu0 0.0
  %1229 = vmatprep.subr.mxu0 0.0
  %1230 = vmatpush1.msra.mxu0 0.0
  %1231 = vmatprep.subr.mxu0 0.0
  %1232 = vmatpush1.msra.mxu0 0.0
  %1233 = vmatprep.subr.mxu0 0.0
  %1234 = vmatpush1.msra.mxu0 0.0
  %1235 = vmatprep.subr.mxu0 0.0
  %1236 = vmatpush1.msra.mxu0 0.0
  %1237 = vmatprep.subr.mxu0 0.0
  %1238 = vmatpush1.msra.mxu0 0.0
  %1239 = vmatprep.subr.mxu0 0.0
  %1240 = vmatpush1.msra.mxu0 0.0
  %1241 = vmatprep.subr.mxu0 0.0
  %1242 = vmatpush1.msra.mxu0 0.0
  %1243 = vmatprep.subr.mxu0 0.0
  %1244 = vmatpush1.msra.mxu0 0.0
  %1245 = vmatprep.subr.mxu0 0.0
  %1246 = vmatpush1.msra.mxu0 0.0
  %1247 = vmatprep.subr.mxu0 0.0
  %1248 = vmatpush1.msra.mxu0 0.0
  %1249 = vmatprep.subr.mxu0 0.0
  %1250 = vmatpush1.msra.mxu0 0.0
  %1251 = vmatprep.subr.mxu0 0.0
  %1252 = vmatpush1.msra.mxu0 0.0
  %1253 = vmatprep.subr.mxu0 0.0
  %1254 = vmatpush1.msra.mxu0 0.0
  %1255 = vmatprep.subr.mxu0 0.0
  %1256 = vmatpush1.msra.mxu0 0.0
  %1257 = vmatprep.subr.mxu0 0.0
  %1258 = vmatpush1.msra.mxu0 0.0
  %1259 = vmatprep.subr.mxu0 0.0
  %1260 = vmatpush1.msra.mxu0 0.0
  %1261 = vmatprep.subr.mxu0 0.0
  %1262 = vmatpush1.msra.mxu0 0.0
  %1263 = vmatprep.subr.mxu0 0.0
  %1264 = vmatpush1.msra.mxu0 0.0
  %1265 = vmatprep.subr.mxu0 0.0
  %1266 = vmatpush1.msra.mxu0 0.0
  %1267 = vmatprep.subr.mxu0 0.0
  %1268 = vmatpush1.msra.mxu0 0.0
  %1269 = vmatprep.subr.mxu0 0.0
  %1270 = vmatpush1.msra.mxu0 0.0
  %1271 = vmatprep.subr.mxu0 0.0
  %1272 = vmatpush1.msra.mxu0 0.0
  %1273 = vmatprep.subr.mxu0 0.0
  %1274 = vmatpush1.msra.mxu0 0.0
  %1275 = vmatprep.subr.mxu0 0.0
  %1276 = vmatpush1.msra.mxu0 0.0
  %1277 = vmatprep.mubr.f32.mxu0 0.0
  %v1278 = vand.u32 %v677, 4294901760
  %1279 = vmatmul.mubr.f32.gmra.mrb[0].mxu0 %v1278
  %v1280 = vpop.f32.mrb[0].mxu0
  %v1281 = vadd.f32 %v1188, %v1280
  %v1282 = vpop.f32.mrb[0].mxu0
  %1283 = vmatprep.mubr.f32.mxu0 0.0
  %v1284 = vand.u32 %v680, 4294901760
  %1285 = vmatmul.mubr.f32.gmra.mrb[0].mxu0 %v1284
  %v1286 = vpop.f32.mrb[0].mxu0
  %v1287 = vadd.f32 %v1194, %v1286
  %v1288 = vpop.f32.mrb[0].mxu0
  %1289 = vmatprep.mubr.f32.mxu0 0.0
  %v1290 = vand.u32 %v683, 4294901760
  %1291 = vmatmul.mubr.f32.gmra.mrb[0].mxu0 %v1290
  %v1292 = vpop.f32.mrb[0].mxu0
  %v1293 = vadd.f32 %v1200, %v1292
  %v1294 = vpop.f32.mrb[0].mxu0
  %1295 = vmatprep.mubr.f32.mxu0 0.0
  %v1296 = vand.u32 %v686, 4294901760
  %1297 = vmatmul.mubr.f32.gmra.mrb[0].mxu0 %v1296
  %v1298 = vpop.f32.mrb[0].mxu0
  %v1299 = vadd.f32 %v1206, %v1298
  %v1300 = vpop.f32.mrb[0].mxu0
  %1301 = vdwg.mxu0
  %v1302 = vmax.f32 %v1281, 0.0
  %v1303 = vmax.f32 %v1287, 0.0
  %v1304 = vmax.f32 %v1293, 0.0
  %v1305 = vmax.f32 %v1299, 0.0
  %v1306 = vld [vmem:[%s5] sm:$0xf]
  %v1307 = vld [vmem:[%s6] sm:$0xf]
  %1309 = vset.pattern.permute.xlu0 0
  %1310 = vperm.xlu0 %1309, %v1307
  %v1311 = vpop.permute.xlu0 %1310
  %v1314 = vsel %vm675, %v1306, 0
  %1316 = vmatprep.subr.mxu0 0.0
  %v1317 = vand.u32 %v1302, 4294901760
  %1318 = vmatpush1.msra.mxu0 %v1317
  %1319 = vmatprep.subr.mxu0 0.0
  %v1320 = vand.u32 %v1303, 4294901760
  %1321 = vmatpush1.msra.mxu0 %v1320
  %1322 = vmatprep.subr.mxu0 0.0
  %v1323 = vand.u32 %v1304, 4294901760
  %1324 = vmatpush1.msra.mxu0 %v1323
  %1325 = vmatprep.subr.mxu0 0.0
  %v1326 = vand.u32 %v1305, 4294901760
  %1327 = vmatpush1.msra.mxu0 %v1326
  %1328 = vmatprep.subr.mxu0 0.0
  %1329 = vmatpush1.msra.mxu0 0.0
  %1330 = vmatprep.subr.mxu0 0.0
  %1331 = vmatpush1.msra.mxu0 0.0
  %1332 = vmatprep.subr.mxu0 0.0
  %1333 = vmatpush1.msra.mxu0 0.0
  %1334 = vmatprep.subr.mxu0 0.0
  %1335 = vmatpush1.msra.mxu0 0.0
  %1336 = vmatprep.subr.mxu0 0.0
  %1337 = vmatpush1.msra.mxu0 0.0
  %1338 = vmatprep.subr.mxu0 0.0
  %1339 = vmatpush1.msra.mxu0 0.0
  %1340 = vmatprep.subr.mxu0 0.0
  %1341 = vmatpush1.msra.mxu0 0.0
  %1342 = vmatprep.subr.mxu0 0.0
  %1343 = vmatpush1.msra.mxu0 0.0
  %1344 = vmatprep.subr.mxu0 0.0
  %1345 = vmatpush1.msra.mxu0 0.0
  %1346 = vmatprep.subr.mxu0 0.0
  %1347 = vmatpush1.msra.mxu0 0.0
  %1348 = vmatprep.subr.mxu0 0.0
  %1349 = vmatpush1.msra.mxu0 0.0
  %1350 = vmatprep.subr.mxu0 0.0
  %1351 = vmatpush1.msra.mxu0 0.0
  %1352 = vmatprep.subr.mxu0 0.0
  %1353 = vmatpush1.msra.mxu0 0.0
  %1354 = vmatprep.subr.mxu0 0.0
  %1355 = vmatpush1.msra.mxu0 0.0
  %1356 = vmatprep.subr.mxu0 0.0
  %1357 = vmatpush1.msra.mxu0 0.0
  %1358 = vmatprep.subr.mxu0 0.0
  %1359 = vmatpush1.msra.mxu0 0.0
  %1360 = vmatprep.subr.mxu0 0.0
  %1361 = vmatpush1.msra.mxu0 0.0
  %1362 = vmatprep.subr.mxu0 0.0
  %1363 = vmatpush1.msra.mxu0 0.0
  %1364 = vmatprep.subr.mxu0 0.0
  %1365 = vmatpush1.msra.mxu0 0.0
  %1366 = vmatprep.subr.mxu0 0.0
  %1367 = vmatpush1.msra.mxu0 0.0
  %1368 = vmatprep.subr.mxu0 0.0
  %1369 = vmatpush1.msra.mxu0 0.0
  %1370 = vmatprep.subr.mxu0 0.0
  %1371 = vmatpush1.msra.mxu0 0.0
  %1372 = vmatprep.subr.mxu0 0.0
  %1373 = vmatpush1.msra.mxu0 0.0
  %1374 = vmatprep.subr.mxu0 0.0
  %1375 = vmatpush1.msra.mxu0 0.0
  %1376 = vmatprep.subr.mxu0 0.0
  %1377 = vmatpush1.msra.mxu0 0.0
  %1378 = vmatprep.subr.mxu0 0.0
  %1379 = vmatpush1.msra.mxu0 0.0
  %1380 = vmatprep.subr.mxu0 0.0
  %1381 = vmatpush1.msra.mxu0 0.0
  %1382 = vmatprep.subr.mxu0 0.0
  %1383 = vmatpush1.msra.mxu0 0.0
  %1384 = vmatprep.mubr.f32.mxu0 0.0
  %v1385 = vand.u32 %v1314, 4294901760
  %v1386 = vsub.f32 %v1314, %v1385
  %v1387 = vand.u32 %v1386, 4294901760
  %v1388 = vsub.f32 %v1386, %v1387
  %v1389 = vand.u32 %v1388, 4294901760
  %1390 = vmatmul.mubr.f32.gmra.mrb[0].mxu0 %v1389
  %v1391 = vpop.f32.mrb[0].mxu0
  %v1392 = vadd.f32 %v1311, %v1391
  %v1393 = vpop.f32.mrb[0].mxu0
  %1394 = vdwg.mxu0
  %1395 = vmatprep.subr.mxu0 0.0
  %v1396 = vand.u32 %v1302, 4294901760
  %v1397 = vsub.f32 %v1302, %v1396
  %v1398 = vand.u32 %v1397, 4294901760
  %v1399 = vsub.f32 %v1397, %v1398
  %v1400 = vand.u32 %v1399, 4294901760
  %1401 = vmatpush1.msra.mxu0 %v1400
  %1402 = vmatprep.subr.mxu0 0.0
  %v1403 = vand.u32 %v1303, 4294901760
  %v1404 = vsub.f32 %v1303, %v1403
  %v1405 = vand.u32 %v1404, 4294901760
  %v1406 = vsub.f32 %v1404, %v1405
  %v1407 = vand.u32 %v1406, 4294901760
  %1408 = vmatpush1.msra.mxu0 %v1407
  %1409 = vmatprep.subr.mxu0 0.0
  %v1410 = vand.u32 %v1304, 4294901760
  %v1411 = vsub.f32 %v1304, %v1410
  %v1412 = vand.u32 %v1411, 4294901760
  %v1413 = vsub.f32 %v1411, %v1412
  %v1414 = vand.u32 %v1413, 4294901760
  %1415 = vmatpush1.msra.mxu0 %v1414
  %1416 = vmatprep.subr.mxu0 0.0
  %v1417 = vand.u32 %v1305, 4294901760
  %v1418 = vsub.f32 %v1305, %v1417
  %v1419 = vand.u32 %v1418, 4294901760
  %v1420 = vsub.f32 %v1418, %v1419
  %v1421 = vand.u32 %v1420, 4294901760
  %1422 = vmatpush1.msra.mxu0 %v1421
  %1423 = vmatprep.subr.mxu0 0.0
  %1424 = vmatpush1.msra.mxu0 0.0
  %1425 = vmatprep.subr.mxu0 0.0
  %1426 = vmatpush1.msra.mxu0 0.0
  %1427 = vmatprep.subr.mxu0 0.0
  %1428 = vmatpush1.msra.mxu0 0.0
  %1429 = vmatprep.subr.mxu0 0.0
  %1430 = vmatpush1.msra.mxu0 0.0
  %1431 = vmatprep.subr.mxu0 0.0
  %1432 = vmatpush1.msra.mxu0 0.0
  %1433 = vmatprep.subr.mxu0 0.0
  %1434 = vmatpush1.msra.mxu0 0.0
  %1435 = vmatprep.subr.mxu0 0.0
  %1436 = vmatpush1.msra.mxu0 0.0
  %1437 = vmatprep.subr.mxu0 0.0
  %1438 = vmatpush1.msra.mxu0 0.0
  %1439 = vmatprep.subr.mxu0 0.0
  %1440 = vmatpush1.msra.mxu0 0.0
  %1441 = vmatprep.subr.mxu0 0.0
  %1442 = vmatpush1.msra.mxu0 0.0
  %1443 = vmatprep.subr.mxu0 0.0
  %1444 = vmatpush1.msra.mxu0 0.0
  %1445 = vmatprep.subr.mxu0 0.0
  %1446 = vmatpush1.msra.mxu0 0.0
  %1447 = vmatprep.subr.mxu0 0.0
  %1448 = vmatpush1.msra.mxu0 0.0
  %1449 = vmatprep.subr.mxu0 0.0
  %1450 = vmatpush1.msra.mxu0 0.0
  %1451 = vmatprep.subr.mxu0 0.0
  %1452 = vmatpush1.msra.mxu0 0.0
  %1453 = vmatprep.subr.mxu0 0.0
  %1454 = vmatpush1.msra.mxu0 0.0
  %1455 = vmatprep.subr.mxu0 0.0
  %1456 = vmatpush1.msra.mxu0 0.0
  %1457 = vmatprep.subr.mxu0 0.0
  %1458 = vmatpush1.msra.mxu0 0.0
  %1459 = vmatprep.subr.mxu0 0.0
  %1460 = vmatpush1.msra.mxu0 0.0
  %1461 = vmatprep.subr.mxu0 0.0
  %1462 = vmatpush1.msra.mxu0 0.0
  %1463 = vmatprep.subr.mxu0 0.0
  %1464 = vmatpush1.msra.mxu0 0.0
  %1465 = vmatprep.subr.mxu0 0.0
  %1466 = vmatpush1.msra.mxu0 0.0
  %1467 = vmatprep.subr.mxu0 0.0
  %1468 = vmatpush1.msra.mxu0 0.0
  %1469 = vmatprep.subr.mxu0 0.0
  %1470 = vmatpush1.msra.mxu0 0.0
  %1471 = vmatprep.subr.mxu0 0.0
  %1472 = vmatpush1.msra.mxu0 0.0
  %1473 = vmatprep.subr.mxu0 0.0
  %1474 = vmatpush1.msra.mxu0 0.0
  %1475 = vmatprep.subr.mxu0 0.0
  %1476 = vmatpush1.msra.mxu0 0.0
  %1477 = vmatprep.subr.mxu0 0.0
  %1478 = vmatpush1.msra.mxu0 0.0
  %1479 = vmatprep.mubr.f32.mxu0 0.0
  %v1480 = vand.u32 %v1314, 4294901760
  %1481 = vmatmul.mubr.f32.gmra.mrb[0].mxu0 %v1480
  %v1482 = vpop.f32.mrb[0].mxu0
  %v1483 = vadd.f32 %v1392, %v1482
  %v1484 = vpop.f32.mrb[0].mxu0
  %1485 = vdwg.mxu0
  %1486 = vmatprep.subr.mxu0 0.0
  %v1487 = vand.u32 %v1302, 4294901760
  %v1488 = vsub.f32 %v1302, %v1487
  %1489 = vmatpush1.msra.mxu0 %v1488
  %1490 = vmatprep.subr.mxu0 0.0
  %v1491 = vand.u32 %v1303, 4294901760
  %v1492 = vsub.f32 %v1303, %v1491
  %1493 = vmatpush1.msra.mxu0 %v1492
  %1494 = vmatprep.subr.mxu0 0.0
  %v1495 = vand.u32 %v1304, 4294901760
  %v1496 = vsub.f32 %v1304, %v1495
  %1497 = vmatpush1.msra.mxu0 %v1496
  %1498 = vmatprep.subr.mxu0 0.0
  %v1499 = vand.u32 %v1305, 4294901760
  %v1500 = vsub.f32 %v1305, %v1499
  %1501 = vmatpush1.msra.mxu0 %v1500
  %1502 = vmatprep.subr.mxu0 0.0
  %1503 = vmatpush1.msra.mxu0 0.0
  %1504 = vmatprep.subr.mxu0 0.0
  %1505 = vmatpush1.msra.mxu0 0.0
  %1506 = vmatprep.subr.mxu0 0.0
  %1507 = vmatpush1.msra.mxu0 0.0
  %1508 = vmatprep.subr.mxu0 0.0
  %1509 = vmatpush1.msra.mxu0 0.0
  %1510 = vmatprep.subr.mxu0 0.0
  %1511 = vmatpush1.msra.mxu0 0.0
  %1512 = vmatprep.subr.mxu0 0.0
  %1513 = vmatpush1.msra.mxu0 0.0
  %1514 = vmatprep.subr.mxu0 0.0
  %1515 = vmatpush1.msra.mxu0 0.0
  %1516 = vmatprep.subr.mxu0 0.0
  %1517 = vmatpush1.msra.mxu0 0.0
  %1518 = vmatprep.subr.mxu0 0.0
  %1519 = vmatpush1.msra.mxu0 0.0
  %1520 = vmatprep.subr.mxu0 0.0
  %1521 = vmatpush1.msra.mxu0 0.0
  %1522 = vmatprep.subr.mxu0 0.0
  %1523 = vmatpush1.msra.mxu0 0.0
  %1524 = vmatprep.subr.mxu0 0.0
  %1525 = vmatpush1.msra.mxu0 0.0
  %1526 = vmatprep.subr.mxu0 0.0
  %1527 = vmatpush1.msra.mxu0 0.0
  %1528 = vmatprep.subr.mxu0 0.0
  %1529 = vmatpush1.msra.mxu0 0.0
  %1530 = vmatprep.subr.mxu0 0.0
  %1531 = vmatpush1.msra.mxu0 0.0
  %1532 = vmatprep.subr.mxu0 0.0
  %1533 = vmatpush1.msra.mxu0 0.0
  %1534 = vmatprep.subr.mxu0 0.0
  %1535 = vmatpush1.msra.mxu0 0.0
  %1536 = vmatprep.subr.mxu0 0.0
  %1537 = vmatpush1.msra.mxu0 0.0
  %1538 = vmatprep.subr.mxu0 0.0
  %1539 = vmatpush1.msra.mxu0 0.0
  %1540 = vmatprep.subr.mxu0 0.0
  %1541 = vmatpush1.msra.mxu0 0.0
  %1542 = vmatprep.subr.mxu0 0.0
  %1543 = vmatpush1.msra.mxu0 0.0
  %1544 = vmatprep.subr.mxu0 0.0
  %1545 = vmatpush1.msra.mxu0 0.0
  %1546 = vmatprep.subr.mxu0 0.0
  %1547 = vmatpush1.msra.mxu0 0.0
  %1548 = vmatprep.subr.mxu0 0.0
  %1549 = vmatpush1.msra.mxu0 0.0
  %1550 = vmatprep.subr.mxu0 0.0
  %1551 = vmatpush1.msra.mxu0 0.0
  %1552 = vmatprep.subr.mxu0 0.0
  %1553 = vmatpush1.msra.mxu0 0.0
  %1554 = vmatprep.subr.mxu0 0.0
  %1555 = vmatpush1.msra.mxu0 0.0
  %1556 = vmatprep.subr.mxu0 0.0
  %1557 = vmatpush1.msra.mxu0 0.0
  %1558 = vmatprep.mubr.f32.mxu0 0.0
  %v1559 = vand.u32 %v1314, 4294901760
  %v1560 = vsub.f32 %v1314, %v1559
  %1561 = vmatmul.mubr.f32.gmra.mrb[0].mxu0 %v1560
  %v1562 = vpop.f32.mrb[0].mxu0
  %v1563 = vadd.f32 %v1483, %v1562
  %v1564 = vpop.f32.mrb[0].mxu0
  %1565 = vdwg.mxu0
  %1566 = vmatprep.subr.mxu0 0.0
  %v1567 = vand.u32 %v1302, 4294901760
  %1568 = vmatpush1.msra.mxu0 %v1567
  %1569 = vmatprep.subr.mxu0 0.0
  %v1570 = vand.u32 %v1303, 4294901760
  %1571 = vmatpush1.msra.mxu0 %v1570
  %1572 = vmatprep.subr.mxu0 0.0
  %v1573 = vand.u32 %v1304, 4294901760
  %1574 = vmatpush1.msra.mxu0 %v1573
  %1575 = vmatprep.subr.mxu0 0.0
  %v1576 = vand.u32 %v1305, 4294901760
  %1577 = vmatpush1.msra.mxu0 %v1576
  %1578 = vmatprep.subr.mxu0 0.0
  %1579 = vmatpush1.msra.mxu0 0.0
  %1580 = vmatprep.subr.mxu0 0.0
  %1581 = vmatpush1.msra.mxu0 0.0
  %1582 = vmatprep.subr.mxu0 0.0
  %1583 = vmatpush1.msra.mxu0 0.0
  %1584 = vmatprep.subr.mxu0 0.0
  %1585 = vmatpush1.msra.mxu0 0.0
  %1586 = vmatprep.subr.mxu0 0.0
  %1587 = vmatpush1.msra.mxu0 0.0
  %1588 = vmatprep.subr.mxu0 0.0
  %1589 = vmatpush1.msra.mxu0 0.0
  %1590 = vmatprep.subr.mxu0 0.0
  %1591 = vmatpush1.msra.mxu0 0.0
  %1592 = vmatprep.subr.mxu0 0.0
  %1593 = vmatpush1.msra.mxu0 0.0
  %1594 = vmatprep.subr.mxu0 0.0
  %1595 = vmatpush1.msra.mxu0 0.0
  %1596 = vmatprep.subr.mxu0 0.0
  %1597 = vmatpush1.msra.mxu0 0.0
  %1598 = vmatprep.subr.mxu0 0.0
  %1599 = vmatpush1.msra.mxu0 0.0
  %1600 = vmatprep.subr.mxu0 0.0
  %1601 = vmatpush1.msra.mxu0 0.0
  %1602 = vmatprep.subr.mxu0 0.0
  %1603 = vmatpush1.msra.mxu0 0.0
  %1604 = vmatprep.subr.mxu0 0.0
  %1605 = vmatpush1.msra.mxu0 0.0
  %1606 = vmatprep.subr.mxu0 0.0
  %1607 = vmatpush1.msra.mxu0 0.0
  %1608 = vmatprep.subr.mxu0 0.0
  %1609 = vmatpush1.msra.mxu0 0.0
  %1610 = vmatprep.subr.mxu0 0.0
  %1611 = vmatpush1.msra.mxu0 0.0
  %1612 = vmatprep.subr.mxu0 0.0
  %1613 = vmatpush1.msra.mxu0 0.0
  %1614 = vmatprep.subr.mxu0 0.0
  %1615 = vmatpush1.msra.mxu0 0.0
  %1616 = vmatprep.subr.mxu0 0.0
  %1617 = vmatpush1.msra.mxu0 0.0
  %1618 = vmatprep.subr.mxu0 0.0
  %1619 = vmatpush1.msra.mxu0 0.0
  %1620 = vmatprep.subr.mxu0 0.0
  %1621 = vmatpush1.msra.mxu0 0.0
  %1622 = vmatprep.subr.mxu0 0.0
  %1623 = vmatpush1.msra.mxu0 0.0
  %1624 = vmatprep.subr.mxu0 0.0
  %1625 = vmatpush1.msra.mxu0 0.0
  %1626 = vmatprep.subr.mxu0 0.0
  %1627 = vmatpush1.msra.mxu0 0.0
  %1628 = vmatprep.subr.mxu0 0.0
  %1629 = vmatpush1.msra.mxu0 0.0
  %1630 = vmatprep.subr.mxu0 0.0
  %1631 = vmatpush1.msra.mxu0 0.0
  %1632 = vmatprep.subr.mxu0 0.0
  %1633 = vmatpush1.msra.mxu0 0.0
  %1634 = vmatprep.mubr.f32.mxu0 0.0
  %v1635 = vand.u32 %v1314, 4294901760
  %v1636 = vsub.f32 %v1314, %v1635
  %v1637 = vand.u32 %v1636, 4294901760
  %1638 = vmatmul.mubr.f32.gmra.mrb[0].mxu0 %v1637
  %v1639 = vpop.f32.mrb[0].mxu0
  %v1640 = vadd.f32 %v1563, %v1639
  %v1641 = vpop.f32.mrb[0].mxu0
  %1642 = vdwg.mxu0
  %1643 = vmatprep.subr.mxu0 0.0
  %v1644 = vand.u32 %v1302, 4294901760
  %v1645 = vsub.f32 %v1302, %v1644
  %v1646 = vand.u32 %v1645, 4294901760
  %1647 = vmatpush1.msra.mxu0 %v1646
  %1648 = vmatprep.subr.mxu0 0.0
  %v1649 = vand.u32 %v1303, 4294901760
  %v1650 = vsub.f32 %v1303, %v1649
  %v1651 = vand.u32 %v1650, 4294901760
  %1652 = vmatpush1.msra.mxu0 %v1651
  %1653 = vmatprep.subr.mxu0 0.0
  %v1654 = vand.u32 %v1304, 4294901760
  %v1655 = vsub.f32 %v1304, %v1654
  %v1656 = vand.u32 %v1655, 4294901760
  %1657 = vmatpush1.msra.mxu0 %v1656
  %1658 = vmatprep.subr.mxu0 0.0
  %v1659 = vand.u32 %v1305, 4294901760
  %v1660 = vsub.f32 %v1305, %v1659
  %v1661 = vand.u32 %v1660, 4294901760
  %1662 = vmatpush1.msra.mxu0 %v1661
  %1663 = vmatprep.subr.mxu0 0.0
  %1664 = vmatpush1.msra.mxu0 0.0
  %1665 = vmatprep.subr.mxu0 0.0
  %1666 = vmatpush1.msra.mxu0 0.0
  %1667 = vmatprep.subr.mxu0 0.0
  %1668 = vmatpush1.msra.mxu0 0.0
  %1669 = vmatprep.subr.mxu0 0.0
  %1670 = vmatpush1.msra.mxu0 0.0
  %1671 = vmatprep.subr.mxu0 0.0
  %1672 = vmatpush1.msra.mxu0 0.0
  %1673 = vmatprep.subr.mxu0 0.0
  %1674 = vmatpush1.msra.mxu0 0.0
  %1675 = vmatprep.subr.mxu0 0.0
  %1676 = vmatpush1.msra.mxu0 0.0
  %1677 = vmatprep.subr.mxu0 0.0
  %1678 = vmatpush1.msra.mxu0 0.0
  %1679 = vmatprep.subr.mxu0 0.0
  %1680 = vmatpush1.msra.mxu0 0.0
  %1681 = vmatprep.subr.mxu0 0.0
  %1682 = vmatpush1.msra.mxu0 0.0
  %1683 = vmatprep.subr.mxu0 0.0
  %1684 = vmatpush1.msra.mxu0 0.0
  %1685 = vmatprep.subr.mxu0 0.0
  %1686 = vmatpush1.msra.mxu0 0.0
  %1687 = vmatprep.subr.mxu0 0.0
  %1688 = vmatpush1.msra.mxu0 0.0
  %1689 = vmatprep.subr.mxu0 0.0
  %1690 = vmatpush1.msra.mxu0 0.0
  %1691 = vmatprep.subr.mxu0 0.0
  %1692 = vmatpush1.msra.mxu0 0.0
  %1693 = vmatprep.subr.mxu0 0.0
  %1694 = vmatpush1.msra.mxu0 0.0
  %1695 = vmatprep.subr.mxu0 0.0
  %1696 = vmatpush1.msra.mxu0 0.0
  %1697 = vmatprep.subr.mxu0 0.0
  %1698 = vmatpush1.msra.mxu0 0.0
  %1699 = vmatprep.subr.mxu0 0.0
  %1700 = vmatpush1.msra.mxu0 0.0
  %1701 = vmatprep.subr.mxu0 0.0
  %1702 = vmatpush1.msra.mxu0 0.0
  %1703 = vmatprep.subr.mxu0 0.0
  %1704 = vmatpush1.msra.mxu0 0.0
  %1705 = vmatprep.subr.mxu0 0.0
  %1706 = vmatpush1.msra.mxu0 0.0
  %1707 = vmatprep.subr.mxu0 0.0
  %1708 = vmatpush1.msra.mxu0 0.0
  %1709 = vmatprep.subr.mxu0 0.0
  %1710 = vmatpush1.msra.mxu0 0.0
  %1711 = vmatprep.subr.mxu0 0.0
  %1712 = vmatpush1.msra.mxu0 0.0
  %1713 = vmatprep.subr.mxu0 0.0
  %1714 = vmatpush1.msra.mxu0 0.0
  %1715 = vmatprep.subr.mxu0 0.0
  %1716 = vmatpush1.msra.mxu0 0.0
  %1717 = vmatprep.subr.mxu0 0.0
  %1718 = vmatpush1.msra.mxu0 0.0
  %1719 = vmatprep.mubr.f32.mxu0 0.0
  %v1720 = vand.u32 %v1314, 4294901760
  %1721 = vmatmul.mubr.f32.gmra.mrb[0].mxu0 %v1720
  %v1722 = vpop.f32.mrb[0].mxu0
  %v1723 = vadd.f32 %v1640, %v1722
  %v1724 = vpop.f32.mrb[0].mxu0
  %1725 = vdwg.mxu0
  %1726 = vmatprep.subr.mxu0 0.0
  %v1727 = vand.u32 %v1302, 4294901760
  %1728 = vmatpush1.msra.mxu0 %v1727
  %1729 = vmatprep.subr.mxu0 0.0
  %v1730 = vand.u32 %v1303, 4294901760
  %1731 = vmatpush1.msra.mxu0 %v1730
  %1732 = vmatprep.subr.mxu0 0.0
  %v1733 = vand.u32 %v1304, 4294901760
  %1734 = vmatpush1.msra.mxu0 %v1733
  %1735 = vmatprep.subr.mxu0 0.0
  %v1736 = vand.u32 %v1305, 4294901760
  %1737 = vmatpush1.msra.mxu0 %v1736
  %1738 = vmatprep.subr.mxu0 0.0
  %1739 = vmatpush1.msra.mxu0 0.0
  %1740 = vmatprep.subr.mxu0 0.0
  %1741 = vmatpush1.msra.mxu0 0.0
  %1742 = vmatprep.subr.mxu0 0.0
  %1743 = vmatpush1.msra.mxu0 0.0
  %1744 = vmatprep.subr.mxu0 0.0
  %1745 = vmatpush1.msra.mxu0 0.0
  %1746 = vmatprep.subr.mxu0 0.0
  %1747 = vmatpush1.msra.mxu0 0.0
  %1748 = vmatprep.subr.mxu0 0.0
  %1749 = vmatpush1.msra.mxu0 0.0
  %1750 = vmatprep.subr.mxu0 0.0
  %1751 = vmatpush1.msra.mxu0 0.0
  %1752 = vmatprep.subr.mxu0 0.0
  %1753 = vmatpush1.msra.mxu0 0.0
  %1754 = vmatprep.subr.mxu0 0.0
  %1755 = vmatpush1.msra.mxu0 0.0
  %1756 = vmatprep.subr.mxu0 0.0
  %1757 = vmatpush1.msra.mxu0 0.0
  %1758 = vmatprep.subr.mxu0 0.0
  %1759 = vmatpush1.msra.mxu0 0.0
  %1760 = vmatprep.subr.mxu0 0.0
  %1761 = vmatpush1.msra.mxu0 0.0
  %1762 = vmatprep.subr.mxu0 0.0
  %1763 = vmatpush1.msra.mxu0 0.0
  %1764 = vmatprep.subr.mxu0 0.0
  %1765 = vmatpush1.msra.mxu0 0.0
  %1766 = vmatprep.subr.mxu0 0.0
  %1767 = vmatpush1.msra.mxu0 0.0
  %1768 = vmatprep.subr.mxu0 0.0
  %1769 = vmatpush1.msra.mxu0 0.0
  %1770 = vmatprep.subr.mxu0 0.0
  %1771 = vmatpush1.msra.mxu0 0.0
  %1772 = vmatprep.subr.mxu0 0.0
  %1773 = vmatpush1.msra.mxu0 0.0
  %1774 = vmatprep.subr.mxu0 0.0
  %1775 = vmatpush1.msra.mxu0 0.0
  %1776 = vmatprep.subr.mxu0 0.0
  %1777 = vmatpush1.msra.mxu0 0.0
  %1778 = vmatprep.subr.mxu0 0.0
  %1779 = vmatpush1.msra.mxu0 0.0
  %1780 = vmatprep.subr.mxu0 0.0
  %1781 = vmatpush1.msra.mxu0 0.0
  %1782 = vmatprep.subr.mxu0 0.0
  %1783 = vmatpush1.msra.mxu0 0.0
  %1784 = vmatprep.subr.mxu0 0.0
  %1785 = vmatpush1.msra.mxu0 0.0
  %1786 = vmatprep.subr.mxu0 0.0
  %1787 = vmatpush1.msra.mxu0 0.0
  %1788 = vmatprep.subr.mxu0 0.0
  %1789 = vmatpush1.msra.mxu0 0.0
  %1790 = vmatprep.subr.mxu0 0.0
  %1791 = vmatpush1.msra.mxu0 0.0
  %1792 = vmatprep.subr.mxu0 0.0
  %1793 = vmatpush1.msra.mxu0 0.0
  %1794 = vmatprep.mubr.f32.mxu0 0.0
  %v1795 = vand.u32 %v1314, 4294901760
  %1796 = vmatmul.mubr.f32.gmra.mrb[0].mxu0 %v1795
  %v1797 = vpop.f32.mrb[0].mxu0
  %v1798 = vadd.f32 %v1723, %v1797
  %v1799 = vpop.f32.mrb[0].mxu0
  %1800 = vdwg.mxu0
  %1801 = vst [vmem:[%s7] sm:$0xf] %v1798
  // Predicated region
  $region30: #{_dqn_forward_stacked.1} parent=0 // pred_check
    _
  $region31: #{_dqn_forward_stacked.1} parent=0 // pred_check_branch
    %1803 = sbr.rel (0) target = $region33
  $region32: #{_dqn_forward_stacked.1} parent=0 // pred_region
    _
  $region33: #{_dqn_forward_stacked.1} parent=0 // pred_fallthru
    _
  // Predicated region
  $region34: #{_dqn_forward_stacked.1} parent=0 // pred_check
    _
  $region35: #{_dqn_forward_stacked.1} parent=0 // pred_check_branch
    %1805 = sbr.rel (0) target = $region37
  $region36: #{_dqn_forward_stacked.1} parent=0 // pred_region
    _
  $region37: #{_dqn_forward_stacked.1} parent=0 // pred_fallthru
    _

</llo_original>
